<compile_context>
chip_gen: v7x
topology: tpu7x:2x2x1
jax: 0.10.0
libtpu: 0.0.40
codegen_flags: <defaults>
</compile_context>

<pallas_src>
import functools
import math

import jax
import jax.numpy as jnp
from jax import lax
from jax.experimental import pallas as pl
from jax.experimental.pallas import tpu as pltpu


def _round_up(x, m):
    return (x + m - 1) // m * m


def _attn_kernel(x_ref, wq_ref, bq_ref, wk_ref, bk_ref, wv_ref, bv_ref,
                 wp_ref, bp_ref, o_ref, k_scr, v_scr, y_scr, *, n_head, tq):
    """Grid = (batch, query_tile).  x_ref is the (T_pad, C) bf16 sequence of the
    current batch element.  K/V are projected and cached at qi == 0; each grid
    step runs causal flash attention for one (tq, C) query tile and writes a
    lane-dense (tq, C) output tile."""
    qi = pl.program_id(1)
    T_pad, C = x_ref.shape
    D = C // n_head
    tk = tq                                    # key tile size == query tile size

    # ---- K/V projection, once per batch element (cached bf16 in VMEM) -------
    @pl.when(qi == 0)
    def _():
        xb = x_ref[...]                                            # (T_pad, C) bf16
        k_scr[...] = (jnp.dot(xb, wk_ref[...],
                              preferred_element_type=jnp.float32)
                      + bk_ref[...]).astype(jnp.bfloat16)
        v_scr[...] = (jnp.dot(xb, wv_ref[...],
                              preferred_element_type=jnp.float32)
                      + bv_ref[...]).astype(jnp.bfloat16)

    # ---- Q projection for this query tile only (1/sqrt(D) baked into wq/bq) -
    q0 = pl.multiple_of(qi * tq, tq)
    xq = x_ref[pl.ds(q0, tq), :]                                   # (tq, C) bf16
    qt = (jnp.dot(xq, wq_ref[...], preferred_element_type=jnp.float32)
          + bq_ref[...]).astype(jnp.bfloat16)                      # (tq, C)

    # causal-mask index helpers, hoisted out of all loops
    rows = q0 + lax.broadcasted_iota(jnp.int32, (tq, tk), 0)
    cols = lax.broadcasted_iota(jnp.int32, (tq, tk), 1)

    # ---- head groups: gw lanes per group so scratch accesses stay aligned ---
    hpg = 1
    for cand in range(min(n_head, max(1, 128 // D)), 0, -1):
        if n_head % cand == 0:
            hpg = cand
            break
    gw = hpg * D
    n_groups = n_head // hpg

    for g in range(n_groups):                                      # static unroll
        g0 = g * gw
        qg = qt[:, g0:g0 + gw]                                     # (tq, gw) bf16

        def kv_step(kt, carry):
            k0 = pl.multiple_of(kt * tk, tk)
            kg = k_scr[pl.ds(k0, tk), g0:g0 + gw]                  # (tk, gw) bf16
            vg = v_scr[pl.ds(k0, tk), g0:g0 + gw]                  # (tk, gw) bf16
            # triangular mask (only non-trivial on the diagonal key tile)
            keep = rows >= (k0 + cols)
            new = []
            for j in range(hpg):                                   # static unroll
                m, l, acc = carry[j]
                dsl = slice(j * D, (j + 1) * D)
                s = lax.dot_general(qg[:, dsl], kg[:, dsl],
                                    (((1,), (1,)), ((), ())),
                                    preferred_element_type=jnp.float32)  # (tq,tk)
                s = jnp.where(keep, s, -1e30)
                m_new = jnp.maximum(m, jnp.max(s, axis=-1, keepdims=True))
                alpha = jnp.exp(m - m_new)
                p = jnp.exp(s - m_new)                             # f32 on EUP
                l_new = alpha * l + jnp.sum(p, axis=-1, keepdims=True)
                acc_new = alpha * acc + jnp.dot(
                    p.astype(jnp.bfloat16), vg[:, dsl],
                    preferred_element_type=jnp.float32)            # (tq, D)
                new.append((m_new, l_new, acc_new))
            return tuple(new)

        init = tuple((jnp.full((tq, 1), -jnp.inf, jnp.float32),
                      jnp.zeros((tq, 1), jnp.float32),
                      jnp.zeros((tq, D), jnp.float32))
                     for _ in range(hpg))
        # causal skipping: only key tiles [0, qi] are ever visited
        final = lax.fori_loop(0, qi + 1, kv_step, init)

        yg = jnp.concatenate([acc * pl.reciprocal(l, approx=True)
                              for (_, l, acc) in final], axis=-1)  # (tq, gw) f32
        y_scr[:, g0:g0 + gw] = yg.astype(jnp.bfloat16)             # aligned store

    # ---- single full-width output projection (contraction dim = C) ----------
    out = (jnp.dot(y_scr[...], wp_ref[...], preferred_element_type=jnp.float32)
           + bp_ref[...])
    o_ref[...] = out.astype(o_ref.dtype)


def causal_self_attention(x, params, n_head, *, q_tile=128):
    """x: (B, T, C) f32.  params: (C_in, C_out) weights in bf16 (Q weights/bias
    pre-scaled by 1/sqrt(head_dim)), biases (1, C) in f32.  Causal mask only."""
    B, T, C = x.shape
    assert C % n_head == 0
    tq = min(q_tile, _round_up(T, 8))
    T_pad = _round_up(T, tq)
    n_qt = T_pad // tq

    xb = x.astype(jnp.bfloat16)
    if T_pad != T:
        xb = jnp.pad(xb, ((0, 0), (0, T_pad - T), (0, 0)))

    kern = functools.partial(_attn_kernel, n_head=n_head, tq=tq)
    out = pl.pallas_call(
        kern,
        out_shape=jax.ShapeDtypeStruct((B, T_pad, C), x.dtype),
        grid=(B, n_qt),
        in_specs=[
            pl.BlockSpec((None, T_pad, C), lambda b, q: (b, 0, 0)),  # x (bf16)
            pl.BlockSpec((C, C), lambda b, q: (0, 0)),               # wq*scale bf16
            pl.BlockSpec((1, C), lambda b, q: (0, 0)),               # bq*scale f32
            pl.BlockSpec((C, C), lambda b, q: (0, 0)),               # wk bf16
            pl.BlockSpec((1, C), lambda b, q: (0, 0)),               # bk f32
            pl.BlockSpec((C, C), lambda b, q: (0, 0)),               # wv bf16
            pl.BlockSpec((1, C), lambda b, q: (0, 0)),               # bv f32
            pl.BlockSpec((C, C), lambda b, q: (0, 0)),               # wp bf16
            pl.BlockSpec((1, C), lambda b, q: (0, 0)),               # bp f32
        ],
        out_specs=pl.BlockSpec((None, tq, C), lambda b, q: (b, q, 0)),
        scratch_shapes=[
            pltpu.VMEM((T_pad, C), jnp.bfloat16),   # K cache
            pltpu.VMEM((T_pad, C), jnp.bfloat16),   # V cache
            pltpu.VMEM((tq, C), jnp.bfloat16),      # packed per-head outputs
        ],
        compiler_params=pltpu.CompilerParams(
            dimension_semantics=("parallel", "arbitrary"),
            vmem_limit_bytes=48 * 1024 * 1024),     # leaves headroom on v7x 64MiB
    )(xb, params["wq"], params["bq"], params["wk"], params["bk"],
      params["wv"], params["bv"], params["wp"], params["bp"])

    if T_pad != T:
        out = out[:, :T, :]
    return out


def pack_params(wq, bq, wk, bk, wv, bv, wp, bp, n_head):
    """Convert f32 nn.Linear-style params ((C_in, C_out) weights, (1, C) biases)
    into the kernel layout: 1/sqrt(D) baked into Q, bf16 weights, f32 biases."""
    C = wq.shape[0]
    scale = 1.0 / math.sqrt(C // n_head)
    return dict(
        wq=(wq * scale).astype(jnp.bfloat16), bq=(bq * scale).astype(jnp.float32),
        wk=wk.astype(jnp.bfloat16), bk=bk.astype(jnp.float32),
        wv=wv.astype(jnp.bfloat16), bv=bv.astype(jnp.float32),
        wp=wp.astype(jnp.bfloat16), bp=bp.astype(jnp.float32),
    )


def _reference(x, wq, bq, wk, bk, wv, bv, wp, bp, n_head):
    """Pure-JAX f32 reference mirroring the PyTorch forward (eval mode)."""
    B, T, C = x.shape
    D = C // n_head
    q = x @ wq + bq
    k = x @ wk + bk
    v = x @ wv + bv
    q = q.reshape(B, T, n_head, D).transpose(0, 2, 1, 3)
    k = k.reshape(B, T, n_head, D).transpose(0, 2, 1, 3)
    v = v.reshape(B, T, n_head, D).transpose(0, 2, 1, 3)
    att = jnp.einsum("bhtd,bhsd->bhts", q, k) * (1.0 / math.sqrt(D))
    mask = jnp.tril(jnp.ones((T, T), jnp.int32))
    att = jnp.where(mask[None, None] == 0, -jnp.inf, att)
    att = jax.nn.softmax(att, axis=-1)
    y = jnp.einsum("bhts,bhsd->bhtd", att, v)
    y = y.transpose(0, 2, 1, 3).reshape(B, T, C)
    return y @ wp + bp


if __name__ == "__main__":
    B, C, n_head = 2, 128, 4    # C multiple of 128 (lane-dense), head_dim = 32

    key = jax.random.PRNGKey(0)
    keys = jax.random.split(key, 10)

    def linear_params(kw, kb):
        w = jax.random.normal(kw, (C, C), jnp.float32) * 0.02
        b = jax.random.normal(kb, (1, C), jnp.float32) * 0.02
        return w, b

    wq, bq = linear_params(keys[0], keys[1])
    wk, bk = linear_params(keys[2], keys[3])
    wv, bv = linear_params(keys[4], keys[5])
    wp, bp = linear_params(keys[6], keys[7])
    params = pack_params(wq, bq, wk, bk, wv, bv, wp, bp, n_head)

    # 1) single query tile per batch element
    T = 16
    x = jax.random.normal(keys[8], (B, T, C), jnp.float32)
    ref = _reference(x, wq, bq, wk, bk, wv, bv, wp, bp, n_head)
    out = jax.block_until_ready(causal_self_attention(x, params, n_head))
    assert out.shape == (B, T, C)
    assert jnp.allclose(out, ref, atol=2e-2, rtol=2e-2), "single-tile mismatch"

    # 2) multi-tile path (exercises qi > 0, the K/V scratch carry and the
    #    causal key-tile fori_loop)
    out2 = jax.block_until_ready(
        causal_self_attention(x, params, n_head, q_tile=8))
    assert jnp.allclose(out2, ref, atol=2e-2, rtol=2e-2), "multi-tile mismatch"

    # 3) ragged T (T % tile != 0) -> zero-padded grid path
    T3 = 24
    x3 = jax.random.normal(keys[9], (B, T3, C), jnp.float32)
    ref3 = _reference(x3, wq, bq, wk, bk, wv, bv, wp, bp, n_head)
    out3 = jax.block_until_ready(
        causal_self_attention(x3, params, n_head, q_tile=16))
    assert out3.shape == (B, T3, C)
    assert jnp.allclose(out3, ref3, atol=2e-2, rtol=2e-2), "ragged-T mismatch"

    print("KERNEL_OK")
</pallas_src>

<mosaic_0001>
module attributes {stable_mosaic.version = 11 : i64} {
  func.func @_attn_kernel(%arg0: i32, %arg1: i32, %arg2: memref<1x16x128xbf16, #tpu.memory_space<vmem>>, %arg3: memref<128x128xbf16, #tpu.memory_space<vmem>>, %arg4: memref<1x128xf32, #tpu.memory_space<vmem>>, %arg5: memref<128x128xbf16, #tpu.memory_space<vmem>>, %arg6: memref<1x128xf32, #tpu.memory_space<vmem>>, %arg7: memref<128x128xbf16, #tpu.memory_space<vmem>>, %arg8: memref<1x128xf32, #tpu.memory_space<vmem>>, %arg9: memref<128x128xbf16, #tpu.memory_space<vmem>>, %arg10: memref<1x128xf32, #tpu.memory_space<vmem>>, %arg11: memref<1x16x128xf32, #tpu.memory_space<vmem>>, %arg12: memref<16x128xbf16, #tpu.memory_space<vmem>>, %arg13: memref<16x128xbf16, #tpu.memory_space<vmem>>, %arg14: memref<16x128xbf16, #tpu.memory_space<vmem>>) attributes {dimension_semantics = [#tpu.dimension_semantics<parallel>, #tpu.dimension_semantics<arbitrary>], iteration_bounds = array<i64: 2, 1>, scalar_prefetch = 0 : i64, scratch_operands = 3 : i64, tpu.core_type = #tpu.core_type<tc>, window_params = [{transform_indices = @transform_0, window_bounds = array<i64: 1, 16, 128>}, {pipeline_mode = #tpu.pipeline_mode<synchronous>, transform_indices = @transform_1, window_bounds = array<i64: 128, 128>}, {pipeline_mode = #tpu.pipeline_mode<synchronous>, transform_indices = @transform_2, window_bounds = array<i64: 1, 128>}, {pipeline_mode = #tpu.pipeline_mode<synchronous>, transform_indices = @transform_3, window_bounds = array<i64: 128, 128>}, {pipeline_mode = #tpu.pipeline_mode<synchronous>, transform_indices = @transform_4, window_bounds = array<i64: 1, 128>}, {pipeline_mode = #tpu.pipeline_mode<synchronous>, transform_indices = @transform_5, window_bounds = array<i64: 128, 128>}, {pipeline_mode = #tpu.pipeline_mode<synchronous>, transform_indices = @transform_6, window_bounds = array<i64: 1, 128>}, {pipeline_mode = #tpu.pipeline_mode<synchronous>, transform_indices = @transform_7, window_bounds = array<i64: 128, 128>}, {pipeline_mode = #tpu.pipeline_mode<synchronous>, transform_indices = @transform_8, window_bounds = array<i64: 1, 128>}, {transform_indices = @transform_9, window_bounds = array<i64: 1, 16, 128>}]} {
    %c0_i32 = arith.constant 0 : i32
    %0 = arith.cmpi eq, %arg1, %c0_i32 : i32
    %1 = arith.extui %0 : i1 to i32
    %c0_i32_0 = arith.constant 0 : i32
    %2 = arith.cmpi ne, %1, %c0_i32_0 : i32
    scf.if %2 {
      %c0_32 = arith.constant 0 : index
      %c0_33 = arith.constant 0 : index
      %c0_34 = arith.constant 0 : index
      %58 = vector.load %arg2[%c0_32, %c0_33, %c0_34] : memref<1x16x128xbf16, #tpu.memory_space<vmem>>, vector<1x16x128xbf16>
      %59 = vector.shape_cast %58 : vector<1x16x128xbf16> to vector<16x128xbf16>
      %c0_35 = arith.constant 0 : index
      %c0_36 = arith.constant 0 : index
      %60 = vector.load %arg5[%c0_35, %c0_36] : memref<128x128xbf16, #tpu.memory_space<vmem>>, vector<128x128xbf16>
      %cst_37 = arith.constant dense<0.000000e+00> : vector<16x128xf32>
      %61 = tpu.matmul %59, %60, %cst_37 {dimension_numbers = #tpu.dot_dimension_numbers<[1], [0], [0], [1], [0, 0, 1, 1], [], []>} : vector<16x128xbf16>, vector<128x128xbf16>, vector<16x128xf32> -> vector<16x128xf32>
      %c0_38 = arith.constant 0 : index
      %c0_39 = arith.constant 0 : index
      %62 = vector.load %arg6[%c0_38, %c0_39] : memref<1x128xf32, #tpu.memory_space<vmem>>, vector<1x128xf32>
      %63 = vector.broadcast %62 : vector<1x128xf32> to vector<16x128xf32>
      %64 = arith.addf %61, %63 : vector<16x128xf32>
      %65 = arith.truncf %64 : vector<16x128xf32> to vector<16x128xbf16>
      %c0_40 = arith.constant 0 : index
      %c0_41 = arith.constant 0 : index
      %66 = vector.load %arg12[%c0_40, %c0_41] : memref<16x128xbf16, #tpu.memory_space<vmem>>, vector<16x128xbf16>
      tpu.vector_store %arg12[%c0_40, %c0_41], %65 {strides = array<i32>} : memref<16x128xbf16, #tpu.memory_space<vmem>>, vector<16x128xbf16>,
      %c0_42 = arith.constant 0 : index
      %c0_43 = arith.constant 0 : index
      %67 = vector.load %arg7[%c0_42, %c0_43] : memref<128x128xbf16, #tpu.memory_space<vmem>>, vector<128x128xbf16>
      %cst_44 = arith.constant dense<0.000000e+00> : vector<16x128xf32>
      %68 = tpu.matmul %59, %67, %cst_44 {dimension_numbers = #tpu.dot_dimension_numbers<[1], [0], [0], [1], [0, 0, 1, 1], [], []>} : vector<16x128xbf16>, vector<128x128xbf16>, vector<16x128xf32> -> vector<16x128xf32>
      %c0_45 = arith.constant 0 : index
      %c0_46 = arith.constant 0 : index
      %69 = vector.load %arg8[%c0_45, %c0_46] : memref<1x128xf32, #tpu.memory_space<vmem>>, vector<1x128xf32>
      %70 = vector.broadcast %69 : vector<1x128xf32> to vector<16x128xf32>
      %71 = arith.addf %68, %70 : vector<16x128xf32>
      %72 = arith.truncf %71 : vector<16x128xf32> to vector<16x128xbf16>
      %c0_47 = arith.constant 0 : index
      %c0_48 = arith.constant 0 : index
      %73 = vector.load %arg13[%c0_47, %c0_48] : memref<16x128xbf16, #tpu.memory_space<vmem>>, vector<16x128xbf16>
      tpu.vector_store %arg13[%c0_47, %c0_48], %72 {strides = array<i32>} : memref<16x128xbf16, #tpu.memory_space<vmem>>, vector<16x128xbf16>,
    } else {
    }
    %c16_i32 = arith.constant 16 : i32
    %3 = arith.muli %arg1, %c16_i32 : i32
    %4 = tpu.assume_multiple %3, 16 : i32
    %c0 = arith.constant 0 : index
    %5 = arith.index_cast %4 : i32 to index
    %c0_1 = arith.constant 0 : index
    %6 = vector.load %arg2[%c0, %5, %c0_1] : memref<1x16x128xbf16, #tpu.memory_space<vmem>>, vector<1x16x128xbf16>
    %7 = vector.shape_cast %6 : vector<1x16x128xbf16> to vector<16x128xbf16>
    %c0_2 = arith.constant 0 : index
    %c0_3 = arith.constant 0 : index
    %8 = vector.load %arg3[%c0_2, %c0_3] : memref<128x128xbf16, #tpu.memory_space<vmem>>, vector<128x128xbf16>
    %cst = arith.constant dense<0.000000e+00> : vector<16x128xf32>
    %9 = tpu.matmul %7, %8, %cst {dimension_numbers = #tpu.dot_dimension_numbers<[1], [0], [0], [1], [0, 0, 1, 1], [], []>} : vector<16x128xbf16>, vector<128x128xbf16>, vector<16x128xf32> -> vector<16x128xf32>
    %c0_4 = arith.constant 0 : index
    %c0_5 = arith.constant 0 : index
    %10 = vector.load %arg4[%c0_4, %c0_5] : memref<1x128xf32, #tpu.memory_space<vmem>>, vector<1x128xf32>
    %11 = vector.broadcast %10 : vector<1x128xf32> to vector<16x128xf32>
    %12 = arith.addf %9, %11 : vector<16x128xf32>
    %13 = arith.truncf %12 : vector<16x128xf32> to vector<16x128xbf16>
    %14 = tpu.iota {dimensions = array<i32: 0>} : vector<16x16xi32>
    %15 = vector.broadcast %4 : i32 to vector<16x16xi32>
    %16 = arith.addi %15, %14 : vector<16x16xi32>
    %17 = tpu.iota {dimensions = array<i32: 1>} : vector<16x16xi32>
    %cst_6 = arith.constant 0xFF800000 : f32
    %18 = vector.broadcast %cst_6 : f32 to vector<16x1xf32>
    %cst_7 = arith.constant 0.000000e+00 : f32
    %19 = vector.broadcast %cst_7 : f32 to vector<16x1xf32>
    %cst_8 = arith.constant 0.000000e+00 : f32
    %20 = vector.broadcast %cst_8 : f32 to vector<16x32xf32>
    %cst_9 = arith.constant 0xFF800000 : f32
    %21 = vector.broadcast %cst_9 : f32 to vector<16x1xf32>
    %cst_10 = arith.constant 0.000000e+00 : f32
    %22 = vector.broadcast %cst_10 : f32 to vector<16x1xf32>
    %cst_11 = arith.constant 0.000000e+00 : f32
    %23 = vector.broadcast %cst_11 : f32 to vector<16x32xf32>
    %cst_12 = arith.constant 0xFF800000 : f32
    %24 = vector.broadcast %cst_12 : f32 to vector<16x1xf32>
    %cst_13 = arith.constant 0.000000e+00 : f32
    %25 = vector.broadcast %cst_13 : f32 to vector<16x1xf32>
    %cst_14 = arith.constant 0.000000e+00 : f32
    %26 = vector.broadcast %cst_14 : f32 to vector<16x32xf32>
    %cst_15 = arith.constant 0xFF800000 : f32
    %27 = vector.broadcast %cst_15 : f32 to vector<16x1xf32>
    %cst_16 = arith.constant 0.000000e+00 : f32
    %28 = vector.broadcast %cst_16 : f32 to vector<16x1xf32>
    %cst_17 = arith.constant 0.000000e+00 : f32
    %29 = vector.broadcast %cst_17 : f32 to vector<16x32xf32>
    %c1_i32 = arith.constant 1 : i32
    %30 = arith.addi %arg1, %c1_i32 : i32
    %c0_i32_18 = arith.constant 0 : i32
    %31 = arith.subi %30, %c0_i32_18 : i32
    %32 = arith.addi %c0_i32_18, %31 : i32
    %c1_i32_19 = arith.constant 1 : i32
    %33:12 = scf.for %arg15 = %c0_i32_18 to %32 step %c1_i32_19 iter_args(%arg16 = %18, %arg17 = %19, %arg18 = %20, %arg19 = %21, %arg20 = %22, %arg21 = %23, %arg22 = %24, %arg23 = %25, %arg24 = %26, %arg25 = %27, %arg26 = %28, %arg27 = %29) -> (vector<16x1xf32>, vector<16x1xf32>, vector<16x32xf32>, vector<16x1xf32>, vector<16x1xf32>, vector<16x32xf32>, vector<16x1xf32>, vector<16x1xf32>, vector<16x32xf32>, vector<16x1xf32>, vector<16x1xf32>, vector<16x32xf32>)  : i32 {
      %c16_i32_32 = arith.constant 16 : i32
      %58 = arith.muli %arg15, %c16_i32_32 : i32
      %59 = tpu.assume_multiple %58, 16 : i32
      %60 = arith.index_cast %59 : i32 to index
      %c0_33 = arith.constant 0 : index
      %61 = vector.load %arg12[%60, %c0_33] : memref<16x128xbf16, #tpu.memory_space<vmem>>, vector<16x128xbf16>
      %62 = arith.index_cast %59 : i32 to index
      %c0_34 = arith.constant 0 : index
      %63 = vector.load %arg13[%62, %c0_34] : memref<16x128xbf16, #tpu.memory_space<vmem>>, vector<16x128xbf16>
      %64 = vector.broadcast %59 : i32 to vector<16x16xi32>
      %65 = arith.addi %64, %17 : vector<16x16xi32>
      %66 = arith.cmpi sge, %16, %65 : vector<16x16xi32>
      %67 = vector.extract_strided_slice %13 {offsets = [0, 0], sizes = [16, 32], strides = [1, 1]} : vector<16x128xbf16> to vector<16x32xbf16>
      %68 = vector.extract_strided_slice %61 {offsets = [0, 0], sizes = [16, 32], strides = [1, 1]} : vector<16x128xbf16> to vector<16x32xbf16>
      %cst_35 = arith.constant dense<0.000000e+00> : vector<16x16xf32>
      %69 = tpu.matmul %67, %68, %cst_35 {dimension_numbers = #tpu.dot_dimension_numbers<[1], [1], [0], [0], [0, 0, 1, 0], [], []>} : vector<16x32xbf16>, vector<16x32xbf16>, vector<16x16xf32> -> vector<16x16xf32>
      %cst_36 = arith.constant -1.000000e+30 : f32
      %70 = vector.broadcast %cst_36 : f32 to vector<16x16xf32>
      %71 = arith.select %66, %69, %70 : vector<16x16xi1>, vector<16x16xf32>
      %cst_37 = arith.constant dense<0xFF800000> : vector<16xf32>
      %72 = vector.multi_reduction <maximumf>, %71, %cst_37 [1] : vector<16x16xf32> to vector<16xf32>
      %73 = vector.shape_cast %72 : vector<16xf32> to vector<16x1xf32>
      %74 = arith.maximumf %arg16, %73 : vector<16x1xf32>
      %75 = arith.subf %arg16, %74 : vector<16x1xf32>
      %76 = math.exp %75 : vector<16x1xf32>
      %77 = vector.broadcast %74 : vector<16x1xf32> to vector<16x16xf32>
      %78 = arith.subf %71, %77 : vector<16x16xf32>
      %79 = math.exp %78 : vector<16x16xf32>
      %80 = arith.mulf %76, %arg17 : vector<16x1xf32>
      %cst_38 = arith.constant dense<0.000000e+00> : vector<16xf32>
      %81 = vector.multi_reduction <add>, %79, %cst_38 [1] : vector<16x16xf32> to vector<16xf32>
      %82 = vector.shape_cast %81 : vector<16xf32> to vector<16x1xf32>
      %83 = arith.addf %80, %82 : vector<16x1xf32>
      %84 = vector.broadcast %76 : vector<16x1xf32> to vector<16x32xf32>
      %85 = arith.mulf %84, %arg18 : vector<16x32xf32>
      %86 = arith.truncf %79 : vector<16x16xf32> to vector<16x16xbf16>
      %87 = vector.extract_strided_slice %63 {offsets = [0, 0], sizes = [16, 32], strides = [1, 1]} : vector<16x128xbf16> to vector<16x32xbf16>
      %cst_39 = arith.constant dense<0.000000e+00> : vector<16x32xf32>
      %88 = tpu.matmul %86, %87, %cst_39 {dimension_numbers = #tpu.dot_dimension_numbers<[1], [0], [0], [1], [0, 0, 1, 1], [], []>} : vector<16x16xbf16>, vector<16x32xbf16>, vector<16x32xf32> -> vector<16x32xf32>
      %89 = arith.addf %85, %88 : vector<16x32xf32>
      %90 = vector.extract_strided_slice %13 {offsets = [0, 32], sizes = [16, 32], strides = [1, 1]} : vector<16x128xbf16> to vector<16x32xbf16>
      %91 = vector.extract_strided_slice %61 {offsets = [0, 32], sizes = [16, 32], strides = [1, 1]} : vector<16x128xbf16> to vector<16x32xbf16>
      %cst_40 = arith.constant dense<0.000000e+00> : vector<16x16xf32>
      %92 = tpu.matmul %90, %91, %cst_40 {dimension_numbers = #tpu.dot_dimension_numbers<[1], [1], [0], [0], [0, 0, 1, 0], [], []>} : vector<16x32xbf16>, vector<16x32xbf16>, vector<16x16xf32> -> vector<16x16xf32>
      %cst_41 = arith.constant -1.000000e+30 : f32
      %93 = vector.broadcast %cst_41 : f32 to vector<16x16xf32>
      %94 = arith.select %66, %92, %93 : vector<16x16xi1>, vector<16x16xf32>
      %cst_42 = arith.constant dense<0xFF800000> : vector<16xf32>
      %95 = vector.multi_reduction <maximumf>, %94, %cst_42 [1] : vector<16x16xf32> to vector<16xf32>
      %96 = vector.shape_cast %95 : vector<16xf32> to vector<16x1xf32>
      %97 = arith.maximumf %arg19, %96 : vector<16x1xf32>
      %98 = arith.subf %arg19, %97 : vector<16x1xf32>
      %99 = math.exp %98 : vector<16x1xf32>
      %100 = vector.broadcast %97 : vector<16x1xf32> to vector<16x16xf32>
      %101 = arith.subf %94, %100 : vector<16x16xf32>
      %102 = math.exp %101 : vector<16x16xf32>
      %103 = arith.mulf %99, %arg20 : vector<16x1xf32>
      %cst_43 = arith.constant dense<0.000000e+00> : vector<16xf32>
      %104 = vector.multi_reduction <add>, %102, %cst_43 [1] : vector<16x16xf32> to vector<16xf32>
      %105 = vector.shape_cast %104 : vector<16xf32> to vector<16x1xf32>
      %106 = arith.addf %103, %105 : vector<16x1xf32>
      %107 = vector.broadcast %99 : vector<16x1xf32> to vector<16x32xf32>
      %108 = arith.mulf %107, %arg21 : vector<16x32xf32>
      %109 = arith.truncf %102 : vector<16x16xf32> to vector<16x16xbf16>
      %110 = vector.extract_strided_slice %63 {offsets = [0, 32], sizes = [16, 32], strides = [1, 1]} : vector<16x128xbf16> to vector<16x32xbf16>
      %cst_44 = arith.constant dense<0.000000e+00> : vector<16x32xf32>
      %111 = tpu.matmul %109, %110, %cst_44 {dimension_numbers = #tpu.dot_dimension_numbers<[1], [0], [0], [1], [0, 0, 1, 1], [], []>} : vector<16x16xbf16>, vector<16x32xbf16>, vector<16x32xf32> -> vector<16x32xf32>
      %112 = arith.addf %108, %111 : vector<16x32xf32>
      %113 = vector.extract_strided_slice %13 {offsets = [0, 64], sizes = [16, 32], strides = [1, 1]} : vector<16x128xbf16> to vector<16x32xbf16>
      %114 = vector.extract_strided_slice %61 {offsets = [0, 64], sizes = [16, 32], strides = [1, 1]} : vector<16x128xbf16> to vector<16x32xbf16>
      %cst_45 = arith.constant dense<0.000000e+00> : vector<16x16xf32>
      %115 = tpu.matmul %113, %114, %cst_45 {dimension_numbers = #tpu.dot_dimension_numbers<[1], [1], [0], [0], [0, 0, 1, 0], [], []>} : vector<16x32xbf16>, vector<16x32xbf16>, vector<16x16xf32> -> vector<16x16xf32>
      %cst_46 = arith.constant -1.000000e+30 : f32
      %116 = vector.broadcast %cst_46 : f32 to vector<16x16xf32>
      %117 = arith.select %66, %115, %116 : vector<16x16xi1>, vector<16x16xf32>
      %cst_47 = arith.constant dense<0xFF800000> : vector<16xf32>
      %118 = vector.multi_reduction <maximumf>, %117, %cst_47 [1] : vector<16x16xf32> to vector<16xf32>
      %119 = vector.shape_cast %118 : vector<16xf32> to vector<16x1xf32>
      %120 = arith.maximumf %arg22, %119 : vector<16x1xf32>
      %121 = arith.subf %arg22, %120 : vector<16x1xf32>
      %122 = math.exp %121 : vector<16x1xf32>
      %123 = vector.broadcast %120 : vector<16x1xf32> to vector<16x16xf32>
      %124 = arith.subf %117, %123 : vector<16x16xf32>
      %125 = math.exp %124 : vector<16x16xf32>
      %126 = arith.mulf %122, %arg23 : vector<16x1xf32>
      %cst_48 = arith.constant dense<0.000000e+00> : vector<16xf32>
      %127 = vector.multi_reduction <add>, %125, %cst_48 [1] : vector<16x16xf32> to vector<16xf32>
      %128 = vector.shape_cast %127 : vector<16xf32> to vector<16x1xf32>
      %129 = arith.addf %126, %128 : vector<16x1xf32>
      %130 = vector.broadcast %122 : vector<16x1xf32> to vector<16x32xf32>
      %131 = arith.mulf %130, %arg24 : vector<16x32xf32>
      %132 = arith.truncf %125 : vector<16x16xf32> to vector<16x16xbf16>
      %133 = vector.extract_strided_slice %63 {offsets = [0, 64], sizes = [16, 32], strides = [1, 1]} : vector<16x128xbf16> to vector<16x32xbf16>
      %cst_49 = arith.constant dense<0.000000e+00> : vector<16x32xf32>
      %134 = tpu.matmul %132, %133, %cst_49 {dimension_numbers = #tpu.dot_dimension_numbers<[1], [0], [0], [1], [0, 0, 1, 1], [], []>} : vector<16x16xbf16>, vector<16x32xbf16>, vector<16x32xf32> -> vector<16x32xf32>
      %135 = arith.addf %131, %134 : vector<16x32xf32>
      %136 = vector.extract_strided_slice %13 {offsets = [0, 96], sizes = [16, 32], strides = [1, 1]} : vector<16x128xbf16> to vector<16x32xbf16>
      %137 = vector.extract_strided_slice %61 {offsets = [0, 96], sizes = [16, 32], strides = [1, 1]} : vector<16x128xbf16> to vector<16x32xbf16>
      %cst_50 = arith.constant dense<0.000000e+00> : vector<16x16xf32>
      %138 = tpu.matmul %136, %137, %cst_50 {dimension_numbers = #tpu.dot_dimension_numbers<[1], [1], [0], [0], [0, 0, 1, 0], [], []>} : vector<16x32xbf16>, vector<16x32xbf16>, vector<16x16xf32> -> vector<16x16xf32>
      %cst_51 = arith.constant -1.000000e+30 : f32
      %139 = vector.broadcast %cst_51 : f32 to vector<16x16xf32>
      %140 = arith.select %66, %138, %139 : vector<16x16xi1>, vector<16x16xf32>
      %cst_52 = arith.constant dense<0xFF800000> : vector<16xf32>
      %141 = vector.multi_reduction <maximumf>, %140, %cst_52 [1] : vector<16x16xf32> to vector<16xf32>
      %142 = vector.shape_cast %141 : vector<16xf32> to vector<16x1xf32>
      %143 = arith.maximumf %arg25, %142 : vector<16x1xf32>
      %144 = arith.subf %arg25, %143 : vector<16x1xf32>
      %145 = math.exp %144 : vector<16x1xf32>
      %146 = vector.broadcast %143 : vector<16x1xf32> to vector<16x16xf32>
      %147 = arith.subf %140, %146 : vector<16x16xf32>
      %148 = math.exp %147 : vector<16x16xf32>
      %149 = arith.mulf %145, %arg26 : vector<16x1xf32>
      %cst_53 = arith.constant dense<0.000000e+00> : vector<16xf32>
      %150 = vector.multi_reduction <add>, %148, %cst_53 [1] : vector<16x16xf32> to vector<16xf32>
      %151 = vector.shape_cast %150 : vector<16xf32> to vector<16x1xf32>
      %152 = arith.addf %149, %151 : vector<16x1xf32>
      %153 = vector.broadcast %145 : vector<16x1xf32> to vector<16x32xf32>
      %154 = arith.mulf %153, %arg27 : vector<16x32xf32>
      %155 = arith.truncf %148 : vector<16x16xf32> to vector<16x16xbf16>
      %156 = vector.extract_strided_slice %63 {offsets = [0, 96], sizes = [16, 32], strides = [1, 1]} : vector<16x128xbf16> to vector<16x32xbf16>
      %cst_54 = arith.constant dense<0.000000e+00> : vector<16x32xf32>
      %157 = tpu.matmul %155, %156, %cst_54 {dimension_numbers = #tpu.dot_dimension_numbers<[1], [0], [0], [1], [0, 0, 1, 1], [], []>} : vector<16x16xbf16>, vector<16x32xbf16>, vector<16x32xf32> -> vector<16x32xf32>
      %158 = arith.addf %154, %157 : vector<16x32xf32>
      scf.yield %74, %83, %89, %97, %106, %112, %120, %129, %135, %143, %152, %158 : vector<16x1xf32>, vector<16x1xf32>, vector<16x32xf32>, vector<16x1xf32>, vector<16x1xf32>, vector<16x32xf32>, vector<16x1xf32>, vector<16x1xf32>, vector<16x32xf32>, vector<16x1xf32>, vector<16x1xf32>, vector<16x32xf32>
    }
    %34 = tpu.reciprocal %33#1 {approx = true} : vector<16x1xf32> -> vector<16x1xf32>
    %35 = vector.broadcast %34 : vector<16x1xf32> to vector<16x32xf32>
    %36 = arith.mulf %33#2, %35 : vector<16x32xf32>
    %37 = tpu.reciprocal %33#4 {approx = true} : vector<16x1xf32> -> vector<16x1xf32>
    %38 = vector.broadcast %37 : vector<16x1xf32> to vector<16x32xf32>
    %39 = arith.mulf %33#5, %38 : vector<16x32xf32>
    %40 = tpu.reciprocal %33#7 {approx = true} : vector<16x1xf32> -> vector<16x1xf32>
    %41 = vector.broadcast %40 : vector<16x1xf32> to vector<16x32xf32>
    %42 = arith.mulf %33#8, %41 : vector<16x32xf32>
    %43 = tpu.reciprocal %33#10 {approx = true} : vector<16x1xf32> -> vector<16x1xf32>
    %44 = vector.broadcast %43 : vector<16x1xf32> to vector<16x32xf32>
    %45 = arith.mulf %33#11, %44 : vector<16x32xf32>
    %46 = tpu.concatenate %36, %39, %42, %45 in 1 : vector<16x32xf32>, vector<16x32xf32>, vector<16x32xf32>, vector<16x32xf32> -> vector<16x128xf32>
    %47 = arith.truncf %46 : vector<16x128xf32> to vector<16x128xbf16>
    %c0_20 = arith.constant 0 : index
    %c0_21 = arith.constant 0 : index
    %48 = vector.load %arg14[%c0_20, %c0_21] : memref<16x128xbf16, #tpu.memory_space<vmem>>, vector<16x128xbf16>
    tpu.vector_store %arg14[%c0_20, %c0_21], %47 {strides = array<i32>} : memref<16x128xbf16, #tpu.memory_space<vmem>>, vector<16x128xbf16>,
    %c0_22 = arith.constant 0 : index
    %c0_23 = arith.constant 0 : index
    %49 = vector.load %arg14[%c0_22, %c0_23] : memref<16x128xbf16, #tpu.memory_space<vmem>>, vector<16x128xbf16>
    %c0_24 = arith.constant 0 : index
    %c0_25 = arith.constant 0 : index
    %50 = vector.load %arg9[%c0_24, %c0_25] : memref<128x128xbf16, #tpu.memory_space<vmem>>, vector<128x128xbf16>
    %cst_26 = arith.constant dense<0.000000e+00> : vector<16x128xf32>
    %51 = tpu.matmul %49, %50, %cst_26 {dimension_numbers = #tpu.dot_dimension_numbers<[1], [0], [0], [1], [0, 0, 1, 1], [], []>} : vector<16x128xbf16>, vector<128x128xbf16>, vector<16x128xf32> -> vector<16x128xf32>
    %c0_27 = arith.constant 0 : index
    %c0_28 = arith.constant 0 : index
    %52 = vector.load %arg10[%c0_27, %c0_28] : memref<1x128xf32, #tpu.memory_space<vmem>>, vector<1x128xf32>
    %53 = vector.broadcast %52 : vector<1x128xf32> to vector<16x128xf32>
    %54 = arith.addf %51, %53 : vector<16x128xf32>
    %c0_29 = arith.constant 0 : index
    %c0_30 = arith.constant 0 : index
    %c0_31 = arith.constant 0 : index
    %55 = vector.load %arg11[%c0_29, %c0_30, %c0_31] : memref<1x16x128xf32, #tpu.memory_space<vmem>>, vector<1x16x128xf32>
    %56 = vector.shape_cast %55 : vector<1x16x128xf32> to vector<16x128xf32>
    %57 = vector.shape_cast %54 : vector<16x128xf32> to vector<1x16x128xf32>
    tpu.vector_store %arg11[%c0_29, %c0_30, %c0_31], %57 {strides = array<i32>} : memref<1x16x128xf32, #tpu.memory_space<vmem>>, vector<1x16x128xf32>,
    return
  }
  func.func @transform_0(%arg0: i32, %arg1: i32) -> (i32, i32, i32) {
    %c0_i32 = arith.constant 0 : i32
    %c0_i32_0 = arith.constant 0 : i32
    %c0_i32_1 = arith.constant 0 : i32
    return %arg0, %c0_i32, %c0_i32_0 : i32, i32, i32
  }
  func.func @transform_1(%arg0: i32, %arg1: i32) -> (i32, i32) {
    %c0_i32 = arith.constant 0 : i32
    %c0_i32_0 = arith.constant 0 : i32
    %c0_i32_1 = arith.constant 0 : i32
    return %c0_i32, %c0_i32_0 : i32, i32
  }
  func.func @transform_2(%arg0: i32, %arg1: i32) -> (i32, i32) {
    %c0_i32 = arith.constant 0 : i32
    %c0_i32_0 = arith.constant 0 : i32
    %c0_i32_1 = arith.constant 0 : i32
    return %c0_i32, %c0_i32_0 : i32, i32
  }
  func.func @transform_3(%arg0: i32, %arg1: i32) -> (i32, i32) {
    %c0_i32 = arith.constant 0 : i32
    %c0_i32_0 = arith.constant 0 : i32
    %c0_i32_1 = arith.constant 0 : i32
    return %c0_i32, %c0_i32_0 : i32, i32
  }
  func.func @transform_4(%arg0: i32, %arg1: i32) -> (i32, i32) {
    %c0_i32 = arith.constant 0 : i32
    %c0_i32_0 = arith.constant 0 : i32
    %c0_i32_1 = arith.constant 0 : i32
    return %c0_i32, %c0_i32_0 : i32, i32
  }
  func.func @transform_5(%arg0: i32, %arg1: i32) -> (i32, i32) {
    %c0_i32 = arith.constant 0 : i32
    %c0_i32_0 = arith.constant 0 : i32
    %c0_i32_1 = arith.constant 0 : i32
    return %c0_i32, %c0_i32_0 : i32, i32
  }
  func.func @transform_6(%arg0: i32, %arg1: i32) -> (i32, i32) {
    %c0_i32 = arith.constant 0 : i32
    %c0_i32_0 = arith.constant 0 : i32
    %c0_i32_1 = arith.constant 0 : i32
    return %c0_i32, %c0_i32_0 : i32, i32
  }
  func.func @transform_7(%arg0: i32, %arg1: i32) -> (i32, i32) {
    %c0_i32 = arith.constant 0 : i32
    %c0_i32_0 = arith.constant 0 : i32
    %c0_i32_1 = arith.constant 0 : i32
    return %c0_i32, %c0_i32_0 : i32, i32
  }
  func.func @transform_8(%arg0: i32, %arg1: i32) -> (i32, i32) {
    %c0_i32 = arith.constant 0 : i32
    %c0_i32_0 = arith.constant 0 : i32
    %c0_i32_1 = arith.constant 0 : i32
    return %c0_i32, %c0_i32_0 : i32, i32
  }
  func.func @transform_9(%arg0: i32, %arg1: i32) -> (i32, i32, i32) {
    %c0_i32 = arith.constant 0 : i32
    %c0_i32_0 = arith.constant 0 : i32
    return %arg0, %arg1, %c0_i32 : i32, i32, i32
  }
}

</mosaic_0001>

<llo_original>
// kernel: tpu_custom_call.1
$region0: #{tpu_custom_call.1}
  #allocation0 [shape = 'u32[]', space=smem, size = 0x4, offset = 0x4, fixed_abs, tag = 'smem constant byte address 0x4 - core index']
  #allocation1 [shape = 'u32[144,128]{1,0:T(1,128)}', space=vmem, size = 0x12000, scoped, tag = 'internal scratch']
  #allocation2 [shape = 'bf16[16,128]{1,0:T(16,128)(2,1)}', space=vmem, size = 0x1000, scoped, tag = 'scratch operand']
  #allocation3 [shape = 'bf16[16,128]{1,0:T(16,128)(2,1)}', space=vmem, size = 0x1000, scoped, tag = 'scratch operand']
  #allocation4 [shape = 'bf16[16,128]{1,0:T(16,128)(2,1)}', space=vmem, size = 0x1000, scoped, tag = 'scratch operand']
  %s0 = inlined_call_operand.hbm [shape: bf16[2,16,128], index: 0, kind: input, shape index: {}]
  %s1 = inlined_call_operand.hbm [shape: bf16[128,128], index: 1, kind: input, shape index: {}]
  %s2 = inlined_call_operand.vmem [shape: f32[1,128], index: 2, kind: input, shape index: {}]
  %s3 = inlined_call_operand.hbm [shape: bf16[128,128], index: 3, kind: input, shape index: {}]
  %s4 = inlined_call_operand.vmem [shape: f32[1,128], index: 4, kind: input, shape index: {}]
  %s5 = inlined_call_operand.hbm [shape: bf16[128,128], index: 5, kind: input, shape index: {}]
  %s6 = inlined_call_operand.vmem [shape: f32[1,128], index: 6, kind: input, shape index: {}]
  %s7 = inlined_call_operand.hbm [shape: bf16[128,128], index: 7, kind: input, shape index: {}]
  %s8 = inlined_call_operand.vmem [shape: f32[1,128], index: 8, kind: input, shape index: {}]
  %s9 = inlined_call_operand.hbm [shape: f32[2,16,128], index: 9, kind: output, shape index: {}]
  %s10 = sld [smem:[#allocation0]]
  $region100: #{tpu_custom_call.1} parent=0
    _
  %s12 = ssub.s32 1, %s10
  %s13 = scalar_select 0, %s12, %s10
  $region1: #{tpu_custom_call.1} parent=0
    #allocation5 [shape = 'u8[8192]{0}', space=vmem, size = 0x2000, scoped, tag = 'input window, operand 0']
    #allocation6 [shape = 's32[2]{0}', space=sflag, size = 0x8, scoped, tag = 'scoped memory for tpu_custom_call.1']
    #allocation7 [shape = 's32[2]{0}', space=sflag, size = 0x8, scoped, tag = 'scoped memory for tpu_custom_call.1']
    #allocation8 [shape = 'u8[32768]{0}', space=vmem, size = 0x8000, scoped, tag = 'input window, operand 1, single buffered']
    #allocation9 [shape = 's32[1]{0}', space=sflag, size = 0x4, scoped, tag = 'scoped memory for tpu_custom_call.1']
    #allocation10 [shape = 'u8[32768]{0}', space=vmem, size = 0x8000, scoped, tag = 'input window, operand 3, single buffered']
    #allocation11 [shape = 'u8[32768]{0}', space=vmem, size = 0x8000, scoped, tag = 'input window, operand 5, single buffered']
    #allocation12 [shape = 's32[1]{0}', space=sflag, size = 0x4, scoped, tag = 'scoped memory for tpu_custom_call.1']
    #allocation13 [shape = 'u8[32768]{0}', space=vmem, size = 0x8000, scoped, tag = 'input window, operand 7, single buffered']
    #allocation14 [shape = 'u8[16384]{0}', space=vmem, size = 0x4000, scoped, tag = 'output window, operand 0']
    %14 = vsyncpa [#allocation6], 0
    %s15 = scalar_lea.sflag [#allocation6], 1
    %16 = vsyncpa %s15, 0
    %17 = vsyncpa [#allocation9], 0
    %18 = vsyncpa [#allocation12], 0
    %19 = vsyncpa [#allocation7], 0
    %s20 = scalar_lea.sflag [#allocation7], 1
    %21 = vsyncpa %s20, 0
    loop: start=0, step=1, limit=4
    $region2: #{tpu_custom_call.1} parent=1 // loop_pre_header
      _
    $region3: #{tpu_custom_call.1} parent=1 // loop_header
      %s23 = sphi 0, %s27
      %p24 = scmp.ge.s32.totalorder %s23, 4
      %s30 = sphi 0, %s42
      %s31 = sphi 0, %s38
      %s32 = sphi 0, %s30
      %s33 = sphi 0, %s31
      %s34 = sphi 0, %s32
      %s35 = sphi 0, %s33
      %s45 = sphi 0, %s47
      %s48 = sphi 0, %s45
      %s49 = sphi 0, %s48
      %s65 = sphi 0, %s49
      %s69 = sphi 0, %s69
      %s71 = sphi 0, %s69
      %s72 = sphi 0, %s71
      %s86 = sphi 0, %s72
      %s90 = sphi 0, %s90
      %s92 = sphi 0, %s90
      %s93 = sphi 0, %s92
      %s107 = sphi 0, %s93
      %s111 = sphi 0, %s111
      %s113 = sphi 0, %s111
      %s114 = sphi 0, %s113
      %s128 = sphi 0, %s114
      %s132 = sphi 0, %s132
      %s134 = sphi 0, %s132
      %s135 = sphi 0, %s134
      %s149 = sphi 0, %s135
      %s153 = sphi 0, %s153
      %s155 = sphi 0, %s153
      %s156 = sphi 0, %s155
      %s170 = sphi 0, %s156
      %s174 = sphi 0, %s174
      %s176 = sphi 0, %s174
      %s177 = sphi 0, %s176
      %s191 = sphi 0, %s177
      %s195 = sphi 0, %s195
      %s197 = sphi 0, %s195
      %s198 = sphi 0, %s197
      %s212 = sphi 0, %s198
      %s216 = sphi 0, %s216
      %s218 = sphi 0, %s216
      %s219 = sphi 0, %s218
      %s233 = sphi 0, %s219
      %s241 = sphi 0, %s243
      %s244 = sphi 0, %s241
      %s245 = sphi 0, %s244
      %s261 = sphi 0, %s245
    $region4: #{tpu_custom_call.1} parent=1 // loop_header_branch
      %26 = sbr.rel (%p24) target = $region8
    $region5: #{tpu_custom_call.1} parent=1 // loop_body
      %s28 = ssub.s32 %s23, 1
      %s29 = ssub.s32 %s23, 2
      %s36 = sadd.s32 1, %s31
      %p37 = scmp.ge.s32.totalorder %s36, 1
      %s38 = scalar_select %p37, 0, %s36
      %s39 = sadd.s32 1, %s30
      %s40 = scalar_select %p37, %s39, %s30
      %p41 = scmp.ge.s32.totalorder %s40, 2
      %s42 = scalar_select %p41, 0, %s40
      %s43 = ssub.s32 %s30, %s42
      %p44 = scmp.eq.s32.totalorder %s43, 0
      %s46 = sadd.s32 %s45, 1
      %s47 = scalar_select %p44, %s45, %s46
      %p50 = pneg %p44
      %p51 = scmp.eq.s32.totalorder %s23, 1
      %p52 = por %p50, %p51
      %p53 = scmp.ne.s32.totalorder %s45, %s48
      %p54 = scmp.eq.s32.totalorder %s23, 0
      %p55 = por %p53, %p54
      %p56 = scmp.ne.s32.totalorder %s45, %s48
      %p57 = scmp.eq.s32.totalorder %s28, 1
      %p58 = por %p56, %p57
      %p59 = scmp.ne.s32.totalorder %s48, %s49
      %p60 = scmp.eq.s32.totalorder %s28, 0
      %p61 = por %p59, %p60
      %p62 = scmp.ne.s32.totalorder %s48, %s49
      %p63 = scmp.eq.s32.totalorder %s29, 1
      %p64 = por %p62, %p63
      %p66 = scmp.ne.s32.totalorder %s49, %s65
      %p67 = scmp.eq.s32.totalorder %s29, 0
      %p68 = por %p66, %p67
      %s70 = sadd.s32 %s69, 1
      %p73 = scmp.eq.s32.totalorder %s23, 1
      %p74 = scmp.ne.s32.totalorder %s69, %s71
      %p75 = scmp.eq.s32.totalorder %s23, 0
      %p76 = por %p74, %p75
      %p77 = scmp.ne.s32.totalorder %s69, %s71
      %p78 = scmp.eq.s32.totalorder %s28, 1
      %p79 = por %p77, %p78
      %p80 = scmp.ne.s32.totalorder %s71, %s72
      %p81 = scmp.eq.s32.totalorder %s28, 0
      %p82 = por %p80, %p81
      %p83 = scmp.ne.s32.totalorder %s71, %s72
      %p84 = scmp.eq.s32.totalorder %s29, 1
      %p85 = por %p83, %p84
      %p87 = scmp.ne.s32.totalorder %s72, %s86
      %p88 = scmp.eq.s32.totalorder %s29, 0
      %p89 = por %p87, %p88
      %s91 = sadd.s32 %s90, 1
      %p94 = scmp.eq.s32.totalorder %s23, 1
      %p95 = scmp.ne.s32.totalorder %s90, %s92
      %p96 = scmp.eq.s32.totalorder %s23, 0
      %p97 = por %p95, %p96
      %p98 = scmp.ne.s32.totalorder %s90, %s92
      %p99 = scmp.eq.s32.totalorder %s28, 1
      %p100 = por %p98, %p99
      %p101 = scmp.ne.s32.totalorder %s92, %s93
      %p102 = scmp.eq.s32.totalorder %s28, 0
      %p103 = por %p101, %p102
      %p104 = scmp.ne.s32.totalorder %s92, %s93
      %p105 = scmp.eq.s32.totalorder %s29, 1
      %p106 = por %p104, %p105
      %p108 = scmp.ne.s32.totalorder %s93, %s107
      %p109 = scmp.eq.s32.totalorder %s29, 0
      %p110 = por %p108, %p109
      %s112 = sadd.s32 %s111, 1
      %p115 = scmp.eq.s32.totalorder %s23, 1
      %p116 = scmp.ne.s32.totalorder %s111, %s113
      %p117 = scmp.eq.s32.totalorder %s23, 0
      %p118 = por %p116, %p117
      %p119 = scmp.ne.s32.totalorder %s111, %s113
      %p120 = scmp.eq.s32.totalorder %s28, 1
      %p121 = por %p119, %p120
      %p122 = scmp.ne.s32.totalorder %s113, %s114
      %p123 = scmp.eq.s32.totalorder %s28, 0
      %p124 = por %p122, %p123
      %p125 = scmp.ne.s32.totalorder %s113, %s114
      %p126 = scmp.eq.s32.totalorder %s29, 1
      %p127 = por %p125, %p126
      %p129 = scmp.ne.s32.totalorder %s114, %s128
      %p130 = scmp.eq.s32.totalorder %s29, 0
      %p131 = por %p129, %p130
      %s133 = sadd.s32 %s132, 1
      %p136 = scmp.eq.s32.totalorder %s23, 1
      %p137 = scmp.ne.s32.totalorder %s132, %s134
      %p138 = scmp.eq.s32.totalorder %s23, 0
      %p139 = por %p137, %p138
      %p140 = scmp.ne.s32.totalorder %s132, %s134
      %p141 = scmp.eq.s32.totalorder %s28, 1
      %p142 = por %p140, %p141
      %p143 = scmp.ne.s32.totalorder %s134, %s135
      %p144 = scmp.eq.s32.totalorder %s28, 0
      %p145 = por %p143, %p144
      %p146 = scmp.ne.s32.totalorder %s134, %s135
      %p147 = scmp.eq.s32.totalorder %s29, 1
      %p148 = por %p146, %p147
      %p150 = scmp.ne.s32.totalorder %s135, %s149
      %p151 = scmp.eq.s32.totalorder %s29, 0
      %p152 = por %p150, %p151
      %s154 = sadd.s32 %s153, 1
      %p157 = scmp.eq.s32.totalorder %s23, 1
      %p158 = scmp.ne.s32.totalorder %s153, %s155
      %p159 = scmp.eq.s32.totalorder %s23, 0
      %p160 = por %p158, %p159
      %p161 = scmp.ne.s32.totalorder %s153, %s155
      %p162 = scmp.eq.s32.totalorder %s28, 1
      %p163 = por %p161, %p162
      %p164 = scmp.ne.s32.totalorder %s155, %s156
      %p165 = scmp.eq.s32.totalorder %s28, 0
      %p166 = por %p164, %p165
      %p167 = scmp.ne.s32.totalorder %s155, %s156
      %p168 = scmp.eq.s32.totalorder %s29, 1
      %p169 = por %p167, %p168
      %p171 = scmp.ne.s32.totalorder %s156, %s170
      %p172 = scmp.eq.s32.totalorder %s29, 0
      %p173 = por %p171, %p172
      %s175 = sadd.s32 %s174, 1
      %p178 = scmp.eq.s32.totalorder %s23, 1
      %p179 = scmp.ne.s32.totalorder %s174, %s176
      %p180 = scmp.eq.s32.totalorder %s23, 0
      %p181 = por %p179, %p180
      %p182 = scmp.ne.s32.totalorder %s174, %s176
      %p183 = scmp.eq.s32.totalorder %s28, 1
      %p184 = por %p182, %p183
      %p185 = scmp.ne.s32.totalorder %s176, %s177
      %p186 = scmp.eq.s32.totalorder %s28, 0
      %p187 = por %p185, %p186
      %p188 = scmp.ne.s32.totalorder %s176, %s177
      %p189 = scmp.eq.s32.totalorder %s29, 1
      %p190 = por %p188, %p189
      %p192 = scmp.ne.s32.totalorder %s177, %s191
      %p193 = scmp.eq.s32.totalorder %s29, 0
      %p194 = por %p192, %p193
      %s196 = sadd.s32 %s195, 1
      %p199 = scmp.eq.s32.totalorder %s23, 1
      %p200 = scmp.ne.s32.totalorder %s195, %s197
      %p201 = scmp.eq.s32.totalorder %s23, 0
      %p202 = por %p200, %p201
      %p203 = scmp.ne.s32.totalorder %s195, %s197
      %p204 = scmp.eq.s32.totalorder %s28, 1
      %p205 = por %p203, %p204
      %p206 = scmp.ne.s32.totalorder %s197, %s198
      %p207 = scmp.eq.s32.totalorder %s28, 0
      %p208 = por %p206, %p207
      %p209 = scmp.ne.s32.totalorder %s197, %s198
      %p210 = scmp.eq.s32.totalorder %s29, 1
      %p211 = por %p209, %p210
      %p213 = scmp.ne.s32.totalorder %s198, %s212
      %p214 = scmp.eq.s32.totalorder %s29, 0
      %p215 = por %p213, %p214
      %s217 = sadd.s32 %s216, 1
      %p220 = scmp.eq.s32.totalorder %s23, 1
      %p221 = scmp.ne.s32.totalorder %s216, %s218
      %p222 = scmp.eq.s32.totalorder %s23, 0
      %p223 = por %p221, %p222
      %p224 = scmp.ne.s32.totalorder %s216, %s218
      %p225 = scmp.eq.s32.totalorder %s28, 1
      %p226 = por %p224, %p225
      %p227 = scmp.ne.s32.totalorder %s218, %s219
      %p228 = scmp.eq.s32.totalorder %s28, 0
      %p229 = por %p227, %p228
      %p230 = scmp.ne.s32.totalorder %s218, %s219
      %p231 = scmp.eq.s32.totalorder %s29, 1
      %p232 = por %p230, %p231
      %p234 = scmp.ne.s32.totalorder %s219, %s233
      %p235 = scmp.eq.s32.totalorder %s29, 0
      %p236 = por %p234, %p235
      %s237 = ssub.s32 %s30, %s42
      %s238 = ssub.s32 %s31, %s38
      %s239 = sor.u32 %s237, %s238
      %p240 = scmp.eq.s32.totalorder %s239, 0
      %s242 = sadd.s32 %s241, 1
      %s243 = scalar_select %p240, %s241, %s242
      %p246 = pneg %p240
      %p247 = scmp.eq.s32.totalorder %s23, 1
      %p248 = por %p246, %p247
      %p249 = scmp.ne.s32.totalorder %s241, %s244
      %p250 = scmp.eq.s32.totalorder %s23, 0
      %p251 = por %p249, %p250
      %p252 = scmp.ne.s32.totalorder %s241, %s244
      %p253 = scmp.eq.s32.totalorder %s28, 1
      %p254 = por %p252, %p253
      %p255 = scmp.ne.s32.totalorder %s244, %s245
      %p256 = scmp.eq.s32.totalorder %s28, 0
      %p257 = por %p255, %p256
      %p258 = scmp.ne.s32.totalorder %s244, %s245
      %p259 = scmp.eq.s32.totalorder %s29, 1
      %p260 = por %p258, %p259
      %p262 = scmp.ne.s32.totalorder %s245, %s261
      %p263 = scmp.eq.s32.totalorder %s29, 0
      %p264 = por %p262, %p263
      %p265 = scmp.le.s32.totalorder 1, %s23
      %p266 = scmp.lt.s32.totalorder %s23, 3
      %p267 = pnand %p265, %p266
      %p268 = pneg %p267
      // Predicated region
      $region9: #{tpu_custom_call.1} parent=5 // pred_check
        _
      $region10: #{tpu_custom_call.1} parent=5 // pred_check_branch
        %270 = sbr.rel (%p267) target = $region12
      $region11: #{tpu_custom_call.1} parent=5 // pred_region
        %s271 = ssub.s32 %s23, 1
        // Predicated region
        $region13: #{tpu_custom_call.1} parent=11 // pred_check
          %p272 = pneg %p82
        $region14: #{tpu_custom_call.1} parent=11 // pred_check_branch
          %274 = sbr.rel (%p272) target = $region16
        $region15: #{tpu_custom_call.1} parent=11 // pred_region
          %s276 = ssub.s32 1024, 1024
          %277 = vsyncadd [#allocation9], %s276
          %s278 = sshll.u32 [#allocation8], 4
          %s279 = int_to_ptr.vmem [resolvable:$true] %s278
          %284 = dma.hbm_to_vmem [thread:$0]  %s1, 1024, %s279, [#allocation9], 64, 64, 4
        $region16: #{tpu_custom_call.1} parent=11 // pred_fallthru
          _
        // Predicated region
        $region17: #{tpu_custom_call.1} parent=11 // pred_check
          %p285 = pneg %p103
        $region18: #{tpu_custom_call.1} parent=11 // pred_check_branch
          %287 = sbr.rel (%p285) target = $region20
        $region19: #{tpu_custom_call.1} parent=11 // pred_region
          _
        $region20: #{tpu_custom_call.1} parent=11 // pred_fallthru
          _
        // Predicated region
        $region21: #{tpu_custom_call.1} parent=11 // pred_check
          %p288 = pneg %p124
        $region22: #{tpu_custom_call.1} parent=11 // pred_check_branch
          %290 = sbr.rel (%p288) target = $region24
        $region23: #{tpu_custom_call.1} parent=11 // pred_region
          %s292 = ssub.s32 1024, 1024
          %293 = vsyncadd [#allocation9], %s292
          %s294 = sshll.u32 [#allocation10], 4
          %s295 = int_to_ptr.vmem [resolvable:$true] %s294
          %300 = dma.hbm_to_vmem [thread:$0]  %s3, 1024, %s295, [#allocation9], 64, 64, 4
        $region24: #{tpu_custom_call.1} parent=11 // pred_fallthru
          _
        // Predicated region
        $region25: #{tpu_custom_call.1} parent=11 // pred_check
          %p301 = pneg %p145
        $region26: #{tpu_custom_call.1} parent=11 // pred_check_branch
          %303 = sbr.rel (%p301) target = $region28
        $region27: #{tpu_custom_call.1} parent=11 // pred_region
          _
        $region28: #{tpu_custom_call.1} parent=11 // pred_fallthru
          _
        // Predicated region
        $region29: #{tpu_custom_call.1} parent=11 // pred_check
          %p304 = pneg %p166
        $region30: #{tpu_custom_call.1} parent=11 // pred_check_branch
          %306 = sbr.rel (%p304) target = $region32
        $region31: #{tpu_custom_call.1} parent=11 // pred_region
          %s308 = ssub.s32 1024, 1024
          %309 = vsyncadd [#allocation12], %s308
          %s310 = sshll.u32 [#allocation11], 4
          %s311 = int_to_ptr.vmem [resolvable:$true] %s310
          %316 = dma.hbm_to_vmem [thread:$0]  %s5, 1024, %s311, [#allocation12], 64, 64, 4
        $region32: #{tpu_custom_call.1} parent=11 // pred_fallthru
          _
        // Predicated region
        $region33: #{tpu_custom_call.1} parent=11 // pred_check
          %p317 = pneg %p187
        $region34: #{tpu_custom_call.1} parent=11 // pred_check_branch
          %319 = sbr.rel (%p317) target = $region36
        $region35: #{tpu_custom_call.1} parent=11 // pred_region
          _
        $region36: #{tpu_custom_call.1} parent=11 // pred_fallthru
          _
        // Predicated region
        $region37: #{tpu_custom_call.1} parent=11 // pred_check
          %p320 = pneg %p208
        $region38: #{tpu_custom_call.1} parent=11 // pred_check_branch
          %322 = sbr.rel (%p320) target = $region40
        $region39: #{tpu_custom_call.1} parent=11 // pred_region
          %s324 = ssub.s32 1024, 1024
          %325 = vsyncadd [#allocation12], %s324
          %s326 = sshll.u32 [#allocation13], 4
          %s327 = int_to_ptr.vmem [resolvable:$true] %s326
          %332 = dma.hbm_to_vmem [thread:$0]  %s7, 1024, %s327, [#allocation12], 64, 64, 4
        $region40: #{tpu_custom_call.1} parent=11 // pred_fallthru
          _
        // Predicated region
        $region41: #{tpu_custom_call.1} parent=11 // pred_check
          %p333 = pneg %p229
        $region42: #{tpu_custom_call.1} parent=11 // pred_check_branch
          %335 = sbr.rel (%p333) target = $region44
        $region43: #{tpu_custom_call.1} parent=11 // pred_region
          _
        $region44: #{tpu_custom_call.1} parent=11 // pred_fallthru
          _
      $region12: #{tpu_custom_call.1} parent=5 // pred_fallthru
        _
      %p336 = scmp.lt.s32.totalorder %s23, 2
      // Predicated region
      $region45: #{tpu_custom_call.1} parent=5 // pred_check
        %p337 = pneg %p336
      $region46: #{tpu_custom_call.1} parent=5 // pred_check_branch
        %339 = sbr.rel (%p337) target = $region48
      $region47: #{tpu_custom_call.1} parent=5 // pred_region
        // Predicated region
        $region49: #{tpu_custom_call.1} parent=47 // pred_check
          %p340 = pneg %p55
        $region50: #{tpu_custom_call.1} parent=47 // pred_check_branch
          %342 = sbr.rel (%p340) target = $region52
        $region51: #{tpu_custom_call.1} parent=47 // pred_region
          %s343 = sand.u32 %s45, 1
          %s344 = scalar_lea.sflag [#allocation6], %s343
          %s345 = sand.u32 %s45, 1
          %s346 = smul.addr %s345, 8
          %s347 = scalar_lea.vmem [#allocation5], %s346
          %s349 = ssub.s32 128, 128
          %350 = vsyncadd %s344, %s349
          %s351 = smul.addr %s30, 2
          %s352 = smul.addr %s351, 64
          %s353 = scalar_lea.hbm %s0, %s352
          %s354 = sshll.u32 %s347, 4
          %s355 = int_to_ptr.vmem [resolvable:$true] %s354
          %360 = dma.hbm_to_vmem [thread:$0]  %s353, 128, %s355, %s344, 64, 64, 4
        $region52: #{tpu_custom_call.1} parent=47 // pred_fallthru
          _
      $region48: #{tpu_custom_call.1} parent=5 // pred_fallthru
        _
      %p361 = scmp.le.s32.totalorder 1, %s23
      %p362 = scmp.lt.s32.totalorder %s23, 3
      %p363 = pnand %p361, %p362
      %p364 = pneg %p363
      // Predicated region
      $region53: #{tpu_custom_call.1} parent=5 // pred_check
        _
      $region54: #{tpu_custom_call.1} parent=5 // pred_check_branch
        %366 = sbr.rel (%p363) target = $region56
      $region55: #{tpu_custom_call.1} parent=5 // pred_region
        %s367 = ssub.s32 %s23, 1
        %s368 = sand.u32 %s48, 1
        %s369 = scalar_lea.sflag [#allocation6], %s368
        %s370 = sand.u32 %s48, 1
        %s371 = smul.addr %s370, 8
        %s372 = scalar_lea.vmem [#allocation5], %s371
        // Predicated region
        $region57: #{tpu_custom_call.1} parent=55 // pred_check
          %p373 = pneg %p61
        $region58: #{tpu_custom_call.1} parent=55 // pred_check_branch
          %375 = sbr.rel (%p373) target = $region60
        $region59: #{tpu_custom_call.1} parent=55 // pred_region
          %376 = dma.done %s369, 128
        $region60: #{tpu_custom_call.1} parent=55 // pred_fallthru
          _
        // Predicated region
        $region61: #{tpu_custom_call.1} parent=55 // pred_check
          %p377 = pneg %p82
        $region62: #{tpu_custom_call.1} parent=55 // pred_check_branch
          %379 = sbr.rel (%p377) target = $region64
        $region63: #{tpu_custom_call.1} parent=55 // pred_region
          %380 = dma.done [#allocation9], 1024
        $region64: #{tpu_custom_call.1} parent=55 // pred_fallthru
          _
        // Predicated region
        $region65: #{tpu_custom_call.1} parent=55 // pred_check
          %p381 = pneg %p124
        $region66: #{tpu_custom_call.1} parent=55 // pred_check_branch
          %383 = sbr.rel (%p381) target = $region68
        $region67: #{tpu_custom_call.1} parent=55 // pred_region
          %384 = dma.done [#allocation9], 1024
        $region68: #{tpu_custom_call.1} parent=55 // pred_fallthru
          _
        // Predicated region
        $region69: #{tpu_custom_call.1} parent=55 // pred_check
          %p385 = pneg %p166
        $region70: #{tpu_custom_call.1} parent=55 // pred_check_branch
          %387 = sbr.rel (%p385) target = $region72
        $region71: #{tpu_custom_call.1} parent=55 // pred_region
          %388 = dma.done [#allocation12], 1024
        $region72: #{tpu_custom_call.1} parent=55 // pred_fallthru
          _
        // Predicated region
        $region73: #{tpu_custom_call.1} parent=55 // pred_check
          %p389 = pneg %p208
        $region74: #{tpu_custom_call.1} parent=55 // pred_check_branch
          %391 = sbr.rel (%p389) target = $region76
        $region75: #{tpu_custom_call.1} parent=55 // pred_region
          %392 = dma.done [#allocation12], 1024
        $region76: #{tpu_custom_call.1} parent=55 // pred_fallthru
          _
        %s393 = sand.u32 %s48, 1
        %s394 = scalar_lea.sflag [#allocation6], %s393
        %s395 = sand.u32 %s48, 1
        %s396 = smul.addr %s395, 8
        %s397 = scalar_lea.vmem [#allocation5], %s396
        %p398 = pneg %p61
        %p399 = pneg %p58
        %p400 = pneg %p82
        %p401 = pneg %p79
        %p402 = pneg %p103
        %p403 = pneg %p100
        %p404 = pneg %p124
        %p405 = pneg %p121
        %p406 = pneg %p145
        %p407 = pneg %p142
        %p408 = pneg %p166
        %p409 = pneg %p163
        %p410 = pneg %p187
        %p411 = pneg %p184
        %p412 = pneg %p208
        %p413 = pneg %p205
        %p414 = pneg %p229
        %p415 = pneg %p226
        %p416 = pneg %p257
        %p417 = pneg %p254
        %s418 = sand.u32 %s244, 1
        %s419 = scalar_lea.sflag [#allocation7], %s418
        %s420 = sand.u32 %s244, 1
        %s421 = smul.addr %s420, 16
        %s422 = scalar_lea.vmem [#allocation14], %s421
        %s423 = smul.u32 2, %s33
        %p425 = scmp.eq.s32.totalorder %s33, 0
        // Predicated region
        $region77: #{tpu_custom_call.1} parent=55 // pred_check
          %p426 = pneg %p425
        $region78: #{tpu_custom_call.1} parent=55 // pred_check_branch
          %428 = sbr.rel (%p426) target = $region80
        $region79: #{tpu_custom_call.1} parent=55 // pred_region
          %v429 = vld [vmem:[%s372] sm:$0xf]
          %v430 = vld [vmem:[%s372 + $0x4] sm:$0xf]
          %v431 = vld [vmem:[#allocation10] sm:$0xf]
          %v432 = vld [vmem:[#allocation10 + $0x4] sm:$0xf]
          %v433 = vld [vmem:[#allocation10 + $0x8] sm:$0xf]
          %v434 = vld [vmem:[#allocation10 + $0xc] sm:$0xf]
          %v435 = vld [vmem:[#allocation10 + $0x10] sm:$0xf]
          %v436 = vld [vmem:[#allocation10 + $0x14] sm:$0xf]
          %v437 = vld [vmem:[#allocation10 + $0x18] sm:$0xf]
          %v438 = vld [vmem:[#allocation10 + $0x1c] sm:$0xf]
          %v439 = vld [vmem:[#allocation10 + $0x20] sm:$0xf]
          %v440 = vld [vmem:[#allocation10 + $0x24] sm:$0xf]
          %v441 = vld [vmem:[#allocation10 + $0x28] sm:$0xf]
          %v442 = vld [vmem:[#allocation10 + $0x2c] sm:$0xf]
          %v443 = vld [vmem:[#allocation10 + $0x30] sm:$0xf]
          %v444 = vld [vmem:[#allocation10 + $0x34] sm:$0xf]
          %v445 = vld [vmem:[#allocation10 + $0x38] sm:$0xf]
          %v446 = vld [vmem:[#allocation10 + $0x3c] sm:$0xf]
          %v447 = vld [vmem:[%s4] sm:$0x1]
          %v449 = vlaneseq
          %v450 = vshrl.u32 %v449, 7
          %v451 = vsub.s32 0, %v450
          %v452 = vrot.slane %v447, %v451
          %v456 = vunpack.c.l.b16 %v429
          %v457 = vunpack.c.l.b16 %v430
          %v458 = vpack.c.b16 %v457, %v456
          %v476 = vunpack.c.l.b16 %v431
          %v477 = vunpack.c.l.b16 %v432
          %v478 = vunpack.c.l.b16 %v433
          %v479 = vunpack.c.l.b16 %v434
          %v480 = vunpack.c.l.b16 %v435
          %v481 = vunpack.c.l.b16 %v436
          %v482 = vunpack.c.l.b16 %v437
          %v483 = vunpack.c.l.b16 %v438
          %v484 = vunpack.c.l.b16 %v439
          %v485 = vunpack.c.l.b16 %v440
          %v486 = vunpack.c.l.b16 %v441
          %v487 = vunpack.c.l.b16 %v442
          %v488 = vunpack.c.l.b16 %v443
          %v489 = vunpack.c.l.b16 %v444
          %v490 = vunpack.c.l.b16 %v445
          %v491 = vunpack.c.l.b16 %v446
          %v492 = vpack.c.b16 %v477, %v476
          %v493 = vpack.c.b16 %v479, %v478
          %v494 = vpack.c.b16 %v481, %v480
          %v495 = vpack.c.b16 %v483, %v482
          %v496 = vpack.c.b16 %v485, %v484
          %v497 = vpack.c.b16 %v487, %v486
          %v498 = vpack.c.b16 %v489, %v488
          %v499 = vpack.c.b16 %v491, %v490
          %508 = vmatprep.subr.bf16.mxu0 0
          %509 = vmatpush1.bf16.msra.mxu0 %v492
          %510 = vmatprep.subr.bf16.mxu0 0
          %511 = vmatpush1.bf16.msra.mxu0 %v493
          %512 = vmatprep.subr.bf16.mxu0 0
          %513 = vmatpush1.bf16.msra.mxu0 %v494
          %514 = vmatprep.subr.bf16.mxu0 0
          %515 = vmatpush1.bf16.msra.mxu0 %v495
          %516 = vmatprep.subr.bf16.mxu0 0
          %517 = vmatpush1.bf16.msra.mxu0 %v496
          %518 = vmatprep.subr.bf16.mxu0 0
          %519 = vmatpush1.bf16.msra.mxu0 %v497
          %520 = vmatprep.subr.bf16.mxu0 0
          %521 = vmatpush1.bf16.msra.mxu0 %v498
          %522 = vmatprep.subr.bf16.mxu0 0
          %523 = vmatpush1.bf16.msra.mxu0 %v499
          %524 = vmatprep.subr.bf16.mxu0 0
          %525 = vmatpush1.bf16.msra.mxu0 0
          %526 = vmatprep.subr.bf16.mxu0 0
          %527 = vmatpush1.bf16.msra.mxu0 0
          %528 = vmatprep.subr.bf16.mxu0 0
          %529 = vmatpush1.bf16.msra.mxu0 0
          %530 = vmatprep.subr.bf16.mxu0 0
          %531 = vmatpush1.bf16.msra.mxu0 0
          %532 = vmatprep.subr.bf16.mxu0 0
          %533 = vmatpush1.bf16.msra.mxu0 0
          %534 = vmatprep.subr.bf16.mxu0 0
          %535 = vmatpush1.bf16.msra.mxu0 0
          %536 = vmatprep.subr.bf16.mxu0 0
          %537 = vmatpush1.bf16.msra.mxu0 0
          %538 = vmatprep.subr.bf16.mxu0 0
          %539 = vmatpush1.bf16.msra.mxu0 0
          %540 = vmatprep.mubr.bf16.mxu0 0
          %541 = vmatmul.mubr.bf16.gmra.mrb[0].mxu0 %v458
          %v542 = vpop.f32.mrb[0].mxu0
          %v543 = vadd.f32 %v452, %v542
          %v544 = vpop.f32.mrb[0].mxu0
          %v545 = vpop.f32.mrb[0].mxu0
          %v546 = vadd.f32 %v452, %v545
          %v547 = vpop.f32.mrb[0].mxu0
          %548 = vdwg.mxu0
          %v549 = vpack.c.bf16 %v546, %v543
          %550 = vst [vmem:[#allocation2] sm:$0xff] %v549
          %v551 = vld [vmem:[#allocation11] sm:$0xf]
          %v552 = vld [vmem:[#allocation11 + $0x4] sm:$0xf]
          %v553 = vld [vmem:[#allocation11 + $0x8] sm:$0xf]
          %v554 = vld [vmem:[#allocation11 + $0xc] sm:$0xf]
          %v555 = vld [vmem:[#allocation11 + $0x10] sm:$0xf]
          %v556 = vld [vmem:[#allocation11 + $0x14] sm:$0xf]
          %v557 = vld [vmem:[#allocation11 + $0x18] sm:$0xf]
          %v558 = vld [vmem:[#allocation11 + $0x1c] sm:$0xf]
          %v559 = vld [vmem:[#allocation11 + $0x20] sm:$0xf]
          %v560 = vld [vmem:[#allocation11 + $0x24] sm:$0xf]
          %v561 = vld [vmem:[#allocation11 + $0x28] sm:$0xf]
          %v562 = vld [vmem:[#allocation11 + $0x2c] sm:$0xf]
          %v563 = vld [vmem:[#allocation11 + $0x30] sm:$0xf]
          %v564 = vld [vmem:[#allocation11 + $0x34] sm:$0xf]
          %v565 = vld [vmem:[#allocation11 + $0x38] sm:$0xf]
          %v566 = vld [vmem:[#allocation11 + $0x3c] sm:$0xf]
          %v567 = vld [vmem:[%s6] sm:$0x1]
          %v569 = vlaneseq
          %v570 = vshrl.u32 %v569, 7
          %v571 = vsub.s32 0, %v570
          %v572 = vrot.slane %v567, %v571
          %v590 = vunpack.c.l.b16 %v551
          %v591 = vunpack.c.l.b16 %v552
          %v592 = vunpack.c.l.b16 %v553
          %v593 = vunpack.c.l.b16 %v554
          %v594 = vunpack.c.l.b16 %v555
          %v595 = vunpack.c.l.b16 %v556
          %v596 = vunpack.c.l.b16 %v557
          %v597 = vunpack.c.l.b16 %v558
          %v598 = vunpack.c.l.b16 %v559
          %v599 = vunpack.c.l.b16 %v560
          %v600 = vunpack.c.l.b16 %v561
          %v601 = vunpack.c.l.b16 %v562
          %v602 = vunpack.c.l.b16 %v563
          %v603 = vunpack.c.l.b16 %v564
          %v604 = vunpack.c.l.b16 %v565
          %v605 = vunpack.c.l.b16 %v566
          %v606 = vpack.c.b16 %v591, %v590
          %v607 = vpack.c.b16 %v593, %v592
          %v608 = vpack.c.b16 %v595, %v594
          %v609 = vpack.c.b16 %v597, %v596
          %v610 = vpack.c.b16 %v599, %v598
          %v611 = vpack.c.b16 %v601, %v600
          %v612 = vpack.c.b16 %v603, %v602
          %v613 = vpack.c.b16 %v605, %v604
          %622 = vmatprep.subr.bf16.mxu0 0
          %623 = vmatpush1.bf16.msra.mxu0 %v606
          %624 = vmatprep.subr.bf16.mxu0 0
          %625 = vmatpush1.bf16.msra.mxu0 %v607
          %626 = vmatprep.subr.bf16.mxu0 0
          %627 = vmatpush1.bf16.msra.mxu0 %v608
          %628 = vmatprep.subr.bf16.mxu0 0
          %629 = vmatpush1.bf16.msra.mxu0 %v609
          %630 = vmatprep.subr.bf16.mxu0 0
          %631 = vmatpush1.bf16.msra.mxu0 %v610
          %632 = vmatprep.subr.bf16.mxu0 0
          %633 = vmatpush1.bf16.msra.mxu0 %v611
          %634 = vmatprep.subr.bf16.mxu0 0
          %635 = vmatpush1.bf16.msra.mxu0 %v612
          %636 = vmatprep.subr.bf16.mxu0 0
          %637 = vmatpush1.bf16.msra.mxu0 %v613
          %638 = vmatprep.subr.bf16.mxu0 0
          %639 = vmatpush1.bf16.msra.mxu0 0
          %640 = vmatprep.subr.bf16.mxu0 0
          %641 = vmatpush1.bf16.msra.mxu0 0
          %642 = vmatprep.subr.bf16.mxu0 0
          %643 = vmatpush1.bf16.msra.mxu0 0
          %644 = vmatprep.subr.bf16.mxu0 0
          %645 = vmatpush1.bf16.msra.mxu0 0
          %646 = vmatprep.subr.bf16.mxu0 0
          %647 = vmatpush1.bf16.msra.mxu0 0
          %648 = vmatprep.subr.bf16.mxu0 0
          %649 = vmatpush1.bf16.msra.mxu0 0
          %650 = vmatprep.subr.bf16.mxu0 0
          %651 = vmatpush1.bf16.msra.mxu0 0
          %652 = vmatprep.subr.bf16.mxu0 0
          %653 = vmatpush1.bf16.msra.mxu0 0
          %654 = vmatprep.mubr.bf16.mxu0 0
          %655 = vmatmul.mubr.bf16.gmra.mrb[0].mxu0 %v458
          %v656 = vpop.f32.mrb[0].mxu0
          %v657 = vadd.f32 %v572, %v656
          %v658 = vpop.f32.mrb[0].mxu0
          %v659 = vpop.f32.mrb[0].mxu0
          %v660 = vadd.f32 %v572, %v659
          %v661 = vpop.f32.mrb[0].mxu0
          %662 = vdwg.mxu0
          %v663 = vpack.c.bf16 %v660, %v657
          %664 = vst [vmem:[#allocation3] sm:$0xff] %v663
        $region80: #{tpu_custom_call.1} parent=55 // pred_fallthru
          _
        %s665 = smul.u32 %s33, 16
        %s666 = sshra.s32 %s665, 3
        %s667 = sand.u32 %s665, 7
        %s668 = smul.addr %s666, 4
        %s669 = scalar_lea.vmem %s372, %s668 [#allocation5]
        %v670 = vld [vmem:[%s669] sm:$0xf]
        %v671 = vld [vmem:[%s669 + $0x4] sm:$0xf]
        %v672 = vld [vmem:[#allocation8] sm:$0xf]
        %v673 = vld [vmem:[#allocation8 + $0x4] sm:$0xf]
        %v674 = vld [vmem:[#allocation8 + $0x8] sm:$0xf]
        %v675 = vld [vmem:[#allocation8 + $0xc] sm:$0xf]
        %v676 = vld [vmem:[#allocation8 + $0x10] sm:$0xf]
        %v677 = vld [vmem:[#allocation8 + $0x14] sm:$0xf]
        %v678 = vld [vmem:[#allocation8 + $0x18] sm:$0xf]
        %v679 = vld [vmem:[#allocation8 + $0x1c] sm:$0xf]
        %v680 = vld [vmem:[#allocation8 + $0x20] sm:$0xf]
        %v681 = vld [vmem:[#allocation8 + $0x24] sm:$0xf]
        %v682 = vld [vmem:[#allocation8 + $0x28] sm:$0xf]
        %v683 = vld [vmem:[#allocation8 + $0x2c] sm:$0xf]
        %v684 = vld [vmem:[#allocation8 + $0x30] sm:$0xf]
        %v685 = vld [vmem:[#allocation8 + $0x34] sm:$0xf]
        %v686 = vld [vmem:[#allocation8 + $0x38] sm:$0xf]
        %v687 = vld [vmem:[#allocation8 + $0x3c] sm:$0xf]
        %v688 = vld [vmem:[%s2] sm:$0x1]
        %v690 = vlaneseq
        %v691 = vshrl.u32 %v690, 7
        %v692 = vsub.s32 0, %v691
        %v693 = vrot.slane %v688, %v692
        %v697 = vunpack.c.l.b16 %v670
        %v698 = vunpack.c.l.b16 %v671
        %v699 = vpack.c.b16 %v698, %v697
        %v717 = vunpack.c.l.b16 %v672
        %v718 = vunpack.c.l.b16 %v673
        %v719 = vunpack.c.l.b16 %v674
        %v720 = vunpack.c.l.b16 %v675
        %v721 = vunpack.c.l.b16 %v676
        %v722 = vunpack.c.l.b16 %v677
        %v723 = vunpack.c.l.b16 %v678
        %v724 = vunpack.c.l.b16 %v679
        %v725 = vunpack.c.l.b16 %v680
        %v726 = vunpack.c.l.b16 %v681
        %v727 = vunpack.c.l.b16 %v682
        %v728 = vunpack.c.l.b16 %v683
        %v729 = vunpack.c.l.b16 %v684
        %v730 = vunpack.c.l.b16 %v685
        %v731 = vunpack.c.l.b16 %v686
        %v732 = vunpack.c.l.b16 %v687
        %v733 = vpack.c.b16 %v718, %v717
        %v734 = vpack.c.b16 %v720, %v719
        %v735 = vpack.c.b16 %v722, %v721
        %v736 = vpack.c.b16 %v724, %v723
        %v737 = vpack.c.b16 %v726, %v725
        %v738 = vpack.c.b16 %v728, %v727
        %v739 = vpack.c.b16 %v730, %v729
        %v740 = vpack.c.b16 %v732, %v731
        %749 = vmatprep.subr.bf16.mxu0 0
        %750 = vmatpush1.bf16.msra.mxu0 %v733
        %751 = vmatprep.subr.bf16.mxu0 0
        %752 = vmatpush1.bf16.msra.mxu0 %v734
        %753 = vmatprep.subr.bf16.mxu0 0
        %754 = vmatpush1.bf16.msra.mxu0 %v735
        %755 = vmatprep.subr.bf16.mxu0 0
        %756 = vmatpush1.bf16.msra.mxu0 %v736
        %757 = vmatprep.subr.bf16.mxu0 0
        %758 = vmatpush1.bf16.msra.mxu0 %v737
        %759 = vmatprep.subr.bf16.mxu0 0
        %760 = vmatpush1.bf16.msra.mxu0 %v738
        %761 = vmatprep.subr.bf16.mxu0 0
        %762 = vmatpush1.bf16.msra.mxu0 %v739
        %763 = vmatprep.subr.bf16.mxu0 0
        %764 = vmatpush1.bf16.msra.mxu0 %v740
        %765 = vmatprep.subr.bf16.mxu0 0
        %766 = vmatpush1.bf16.msra.mxu0 0
        %767 = vmatprep.subr.bf16.mxu0 0
        %768 = vmatpush1.bf16.msra.mxu0 0
        %769 = vmatprep.subr.bf16.mxu0 0
        %770 = vmatpush1.bf16.msra.mxu0 0
        %771 = vmatprep.subr.bf16.mxu0 0
        %772 = vmatpush1.bf16.msra.mxu0 0
        %773 = vmatprep.subr.bf16.mxu0 0
        %774 = vmatpush1.bf16.msra.mxu0 0
        %775 = vmatprep.subr.bf16.mxu0 0
        %776 = vmatpush1.bf16.msra.mxu0 0
        %777 = vmatprep.subr.bf16.mxu0 0
        %778 = vmatpush1.bf16.msra.mxu0 0
        %779 = vmatprep.subr.bf16.mxu0 0
        %780 = vmatpush1.bf16.msra.mxu0 0
        %781 = vmatprep.mubr.bf16.mxu0 0
        %782 = vmatmul.mubr.bf16.gmra.mrb[0].mxu0 %v699
        %v783 = vpop.f32.mrb[0].mxu0
        %v784 = vadd.f32 %v693, %v783
        %v785 = vpop.f32.mrb[0].mxu0
        %v786 = vpop.f32.mrb[0].mxu0
        %v787 = vadd.f32 %v693, %v786
        %v788 = vpop.f32.mrb[0].mxu0
        %789 = vdwg.mxu0
        %v790 = vpack.c.bf16 %v787, %v784
        %v791 = vlaneseq
        %v792 = vshrl.u32 %v791, 7
        %v793 = vadd.s32 %v792, 8
        %v794 = vstv %s665
        %v795 = vadd.s32 %v794, %v792
        %v796 = vadd.s32 %v794, %v793
        %v797 = vlaneseq
        %v798 = vand.u32 %v797, 127
        %s799 = sadd.s32 %s33, 1
        // While loop
        $region81: #{tpu_custom_call.1} parent=55 // loop_pre_header
          _
        $region82: #{tpu_custom_call.1} parent=55 // loop_header
          %s801 = sphi 0, %s803
          %p802 = scmp.ge.s32.totalorder %s801, %s799
          %v806 = vphi -inf, %v900
          %v807 = vphi -inf, %v901
          %v808 = vphi 0.0, %v922
          %v809 = vphi 0.0, %v923
          %v810 = vphi 0.0, %v971
          %v811 = vphi 0.0, %v972
          %v812 = vphi -inf, %v1034
          %v813 = vphi -inf, %v1035
          %v814 = vphi 0.0, %v1056
          %v815 = vphi 0.0, %v1057
          %v816 = vphi 0.0, %v1109
          %v817 = vphi 0.0, %v1110
          %v818 = vphi -inf, %v1170
          %v819 = vphi -inf, %v1171
          %v820 = vphi 0.0, %v1192
          %v821 = vphi 0.0, %v1193
          %v822 = vphi 0.0, %v1244
          %v823 = vphi 0.0, %v1245
          %v824 = vphi -inf, %v1305
          %v825 = vphi -inf, %v1306
          %v826 = vphi 0.0, %v1327
          %v827 = vphi 0.0, %v1328
          %v828 = vphi 0.0, %v1379
          %v829 = vphi 0.0, %v1380
        $region83: #{tpu_custom_call.1} parent=55 // loop_header_branch
          %805 = sbr.rel (%p802) target = $region87
        $region84: #{tpu_custom_call.1} parent=55 // loop_body
          %s830 = smul.u32 %s801, 16
          %s831 = sshra.s32 %s830, 4
          %s832 = sand.u32 %s830, 15
          %s833 = smul.addr %s831, 8
          %s834 = scalar_lea.vmem [#allocation2], %s833
          %v835 = vld [vmem:[%s834] sm:$0xff]
          %s836 = smul.addr %s831, 8
          %s837 = scalar_lea.vmem [#allocation3], %s836
          %v838 = vld [vmem:[%s837] sm:$0xff]
          %v839 = vstv %s830
          %v840 = vadd.s32 %v839, %v798
          %vm841 = vcmp.ge.s32.totalorder %v795, %v840
          %vm842 = vcmp.ge.s32.totalorder %v796, %v840
          %vm843 = vcmask 261120
          %v845 = vsel %vm843, %v790, 0
          %v848 = vsel %vm843, %v835, 0
          %850 = vmatprep.subr.bf16.mxu0 0
          %851 = vmatpush1.bf16.xpose.msra.mxu0 %v848
          %852 = vmatprep.subr.bf16.mxu0 0
          %853 = vmatpush1.bf16.xpose.msra.mxu0 0
          %854 = vmatprep.subr.bf16.mxu0 0
          %855 = vmatpush1.bf16.xpose.msra.mxu0 0
          %856 = vmatprep.subr.bf16.mxu0 0
          %857 = vmatpush1.bf16.xpose.msra.mxu0 0
          %858 = vmatprep.subr.bf16.mxu0 0
          %859 = vmatpush1.bf16.xpose.msra.mxu0 0
          %860 = vmatprep.subr.bf16.mxu0 0
          %861 = vmatpush1.bf16.xpose.msra.mxu0 0
          %862 = vmatprep.subr.bf16.mxu0 0
          %863 = vmatpush1.bf16.xpose.msra.mxu0 0
          %864 = vmatprep.subr.bf16.mxu0 0
          %865 = vmatpush1.bf16.xpose.msra.mxu0 0
          %866 = vmatprep.subr.bf16.mxu0 0
          %867 = vmatpush1.bf16.xpose.msra.mxu0 0
          %868 = vmatprep.subr.bf16.mxu0 0
          %869 = vmatpush1.bf16.xpose.msra.mxu0 0
          %870 = vmatprep.subr.bf16.mxu0 0
          %871 = vmatpush1.bf16.xpose.msra.mxu0 0
          %872 = vmatprep.subr.bf16.mxu0 0
          %873 = vmatpush1.bf16.xpose.msra.mxu0 0
          %874 = vmatprep.subr.bf16.mxu0 0
          %875 = vmatpush1.bf16.xpose.msra.mxu0 0
          %876 = vmatprep.subr.bf16.mxu0 0
          %877 = vmatpush1.bf16.xpose.msra.mxu0 0
          %878 = vmatprep.subr.bf16.mxu0 0
          %879 = vmatpush1.bf16.xpose.msra.mxu0 0
          %880 = vmatprep.subr.bf16.mxu0 0
          %881 = vmatpush1.bf16.xpose.msra.mxu0 0
          %882 = vmatprep.mubr.bf16.mxu0 0
          %883 = vmatmul.mubr.bf16.gmra.mrb[0].mxu0 %v845
          %v884 = vpop.f32.mrb[0].mxu0
          %v885 = vadd.f32 0.0, %v884
          %v886 = vpop.f32.mrb[0].mxu0
          %v887 = vpop.f32.mrb[0].mxu0
          %v888 = vadd.f32 0.0, %v887
          %v889 = vpop.f32.mrb[0].mxu0
          %890 = vdwg.mxu0
          %v891 = vsel %vm841, %v885, -1e+30
          %v892 = vsel %vm842, %v888, -1e+30
          %vm893 = vcmask 130048
          %v894 = vsel %vm893, %v891, -inf
          %895 = vmax.xlane.f32.xlu0 %v894
          %v896 = vpop.xlane.xlu0 %895
          %v897 = vsel %vm893, %v892, -inf
          %898 = vmax.xlane.f32.xlu0 %v897
          %v899 = vpop.xlane.xlu0 %898
          %v900 = vmax.f32 %v806, %v896
          %v901 = vmax.f32 %v807, %v899
          %v902 = vsub.f32 %v806, %v900
          %v903 = vsub.f32 %v807, %v901
          %v904 = vmul.f32 %v902, 1.442695
          %v905 = vpow.pop %v904
          %v906 = vmul.f32 %v903, 1.442695
          %v907 = vpow.pop %v906
          %v908 = vsub.f32 %v891, %v900
          %v909 = vsub.f32 %v892, %v901
          %v910 = vmul.f32 %v908, 1.442695
          %v911 = vpow.pop %v910
          %v912 = vmul.f32 %v909, 1.442695
          %v913 = vpow.pop %v912
          %v914 = vmul.f32 %v905, %v808
          %v915 = vmul.f32 %v907, %v809
          %v916 = vsel %vm893, %v911, 0.0
          %917 = vadd.xlane.f32.xlu0 %v916
          %v918 = vpop.xlane.xlu0 %917
          %v919 = vsel %vm893, %v913, 0.0
          %920 = vadd.xlane.f32.xlu0 %v919
          %v921 = vpop.xlane.xlu0 %920
          %v922 = vadd.f32 %v914, %v918
          %v923 = vadd.f32 %v915, %v921
          %v924 = vmul.f32 %v905, %v810
          %v925 = vmul.f32 %v907, %v811
          %v926 = vpack.c.bf16 %v913, %v911
          %v928 = vsel %vm893, %v926, 0
          %930 = vmatprep.subr.bf16.mxu0 0
          %931 = vmatpush1.bf16.msra.mxu0 %v838
          %932 = vmatprep.subr.bf16.mxu0 0
          %933 = vmatpush1.bf16.msra.mxu0 0
          %934 = vmatprep.subr.bf16.mxu0 0
          %935 = vmatpush1.bf16.msra.mxu0 0
          %936 = vmatprep.subr.bf16.mxu0 0
          %937 = vmatpush1.bf16.msra.mxu0 0
          %938 = vmatprep.subr.bf16.mxu0 0
          %939 = vmatpush1.bf16.msra.mxu0 0
          %940 = vmatprep.subr.bf16.mxu0 0
          %941 = vmatpush1.bf16.msra.mxu0 0
          %942 = vmatprep.subr.bf16.mxu0 0
          %943 = vmatpush1.bf16.msra.mxu0 0
          %944 = vmatprep.subr.bf16.mxu0 0
          %945 = vmatpush1.bf16.msra.mxu0 0
          %946 = vmatprep.subr.bf16.mxu0 0
          %947 = vmatpush1.bf16.msra.mxu0 0
          %948 = vmatprep.subr.bf16.mxu0 0
          %949 = vmatpush1.bf16.msra.mxu0 0
          %950 = vmatprep.subr.bf16.mxu0 0
          %951 = vmatpush1.bf16.msra.mxu0 0
          %952 = vmatprep.subr.bf16.mxu0 0
          %953 = vmatpush1.bf16.msra.mxu0 0
          %954 = vmatprep.subr.bf16.mxu0 0
          %955 = vmatpush1.bf16.msra.mxu0 0
          %956 = vmatprep.subr.bf16.mxu0 0
          %957 = vmatpush1.bf16.msra.mxu0 0
          %958 = vmatprep.subr.bf16.mxu0 0
          %959 = vmatpush1.bf16.msra.mxu0 0
          %960 = vmatprep.subr.bf16.mxu0 0
          %961 = vmatpush1.bf16.msra.mxu0 0
          %962 = vmatprep.mubr.bf16.mxu0 0
          %963 = vmatmul.mubr.bf16.gmra.mrb[0].mxu0 %v928
          %v964 = vpop.f32.mrb[0].mxu0
          %v965 = vadd.f32 0.0, %v964
          %v966 = vpop.f32.mrb[0].mxu0
          %v967 = vpop.f32.mrb[0].mxu0
          %v968 = vadd.f32 0.0, %v967
          %v969 = vpop.f32.mrb[0].mxu0
          %970 = vdwg.mxu0
          %v971 = vadd.f32 %v924, %v965
          %v972 = vadd.f32 %v925, %v968
          %974 = vrot.lane.b32.xlu0 %v790, 96
          %v975 = vpop.permute.xlu0 %974
          %977 = vrot.lane.b32.xlu0 %v835, 96
          %v978 = vpop.permute.xlu0 %977
          %v980 = vsel %vm843, %v975, 0
          %v983 = vsel %vm843, %v978, 0
          %985 = vmatprep.subr.bf16.mxu0 0
          %986 = vmatpush1.bf16.xpose.msra.mxu0 %v983
          %987 = vmatprep.subr.bf16.mxu0 0
          %988 = vmatpush1.bf16.xpose.msra.mxu0 0
          %989 = vmatprep.subr.bf16.mxu0 0
          %990 = vmatpush1.bf16.xpose.msra.mxu0 0
          %991 = vmatprep.subr.bf16.mxu0 0
          %992 = vmatpush1.bf16.xpose.msra.mxu0 0
          %993 = vmatprep.subr.bf16.mxu0 0
          %994 = vmatpush1.bf16.xpose.msra.mxu0 0
          %995 = vmatprep.subr.bf16.mxu0 0
          %996 = vmatpush1.bf16.xpose.msra.mxu0 0
          %997 = vmatprep.subr.bf16.mxu0 0
          %998 = vmatpush1.bf16.xpose.msra.mxu0 0
          %999 = vmatprep.subr.bf16.mxu0 0
          %1000 = vmatpush1.bf16.xpose.msra.mxu0 0
          %1001 = vmatprep.subr.bf16.mxu0 0
          %1002 = vmatpush1.bf16.xpose.msra.mxu0 0
          %1003 = vmatprep.subr.bf16.mxu0 0
          %1004 = vmatpush1.bf16.xpose.msra.mxu0 0
          %1005 = vmatprep.subr.bf16.mxu0 0
          %1006 = vmatpush1.bf16.xpose.msra.mxu0 0
          %1007 = vmatprep.subr.bf16.mxu0 0
          %1008 = vmatpush1.bf16.xpose.msra.mxu0 0
          %1009 = vmatprep.subr.bf16.mxu0 0
          %1010 = vmatpush1.bf16.xpose.msra.mxu0 0
          %1011 = vmatprep.subr.bf16.mxu0 0
          %1012 = vmatpush1.bf16.xpose.msra.mxu0 0
          %1013 = vmatprep.subr.bf16.mxu0 0
          %1014 = vmatpush1.bf16.xpose.msra.mxu0 0
          %1015 = vmatprep.subr.bf16.mxu0 0
          %1016 = vmatpush1.bf16.xpose.msra.mxu0 0
          %1017 = vmatprep.mubr.bf16.mxu0 0
          %1018 = vmatmul.mubr.bf16.gmra.mrb[0].mxu0 %v980
          %v1019 = vpop.f32.mrb[0].mxu0
          %v1020 = vadd.f32 0.0, %v1019
          %v1021 = vpop.f32.mrb[0].mxu0
          %v1022 = vpop.f32.mrb[0].mxu0
          %v1023 = vadd.f32 0.0, %v1022
          %v1024 = vpop.f32.mrb[0].mxu0
          %1025 = vdwg.mxu0
          %v1026 = vsel %vm841, %v1020, -1e+30
          %v1027 = vsel %vm842, %v1023, -1e+30
          %v1028 = vsel %vm893, %v1026, -inf
          %1029 = vmax.xlane.f32.xlu0 %v1028
          %v1030 = vpop.xlane.xlu0 %1029
          %v1031 = vsel %vm893, %v1027, -inf
          %1032 = vmax.xlane.f32.xlu0 %v1031
          %v1033 = vpop.xlane.xlu0 %1032
          %v1034 = vmax.f32 %v812, %v1030
          %v1035 = vmax.f32 %v813, %v1033
          %v1036 = vsub.f32 %v812, %v1034
          %v1037 = vsub.f32 %v813, %v1035
          %v1038 = vmul.f32 %v1036, 1.442695
          %v1039 = vpow.pop %v1038
          %v1040 = vmul.f32 %v1037, 1.442695
          %v1041 = vpow.pop %v1040
          %v1042 = vsub.f32 %v1026, %v1034
          %v1043 = vsub.f32 %v1027, %v1035
          %v1044 = vmul.f32 %v1042, 1.442695
          %v1045 = vpow.pop %v1044
          %v1046 = vmul.f32 %v1043, 1.442695
          %v1047 = vpow.pop %v1046
          %v1048 = vmul.f32 %v1039, %v814
          %v1049 = vmul.f32 %v1041, %v815
          %v1050 = vsel %vm893, %v1045, 0.0
          %1051 = vadd.xlane.f32.xlu0 %v1050
          %v1052 = vpop.xlane.xlu0 %1051
          %v1053 = vsel %vm893, %v1047, 0.0
          %1054 = vadd.xlane.f32.xlu0 %v1053
          %v1055 = vpop.xlane.xlu0 %1054
          %v1056 = vadd.f32 %v1048, %v1052
          %v1057 = vadd.f32 %v1049, %v1055
          %v1058 = vmul.f32 %v1039, %v816
          %v1059 = vmul.f32 %v1041, %v817
          %v1060 = vpack.c.bf16 %v1047, %v1045
          %1062 = vrot.lane.b32.xlu0 %v838, 96
          %v1063 = vpop.permute.xlu0 %1062
          %v1066 = vsel %vm893, %v1060, 0
          %1068 = vmatprep.subr.bf16.mxu0 0
          %1069 = vmatpush1.bf16.msra.mxu0 %v1063
          %1070 = vmatprep.subr.bf16.mxu0 0
          %1071 = vmatpush1.bf16.msra.mxu0 0
          %1072 = vmatprep.subr.bf16.mxu0 0
          %1073 = vmatpush1.bf16.msra.mxu0 0
          %1074 = vmatprep.subr.bf16.mxu0 0
          %1075 = vmatpush1.bf16.msra.mxu0 0
          %1076 = vmatprep.subr.bf16.mxu0 0
          %1077 = vmatpush1.bf16.msra.mxu0 0
          %1078 = vmatprep.subr.bf16.mxu0 0
          %1079 = vmatpush1.bf16.msra.mxu0 0
          %1080 = vmatprep.subr.bf16.mxu0 0
          %1081 = vmatpush1.bf16.msra.mxu0 0
          %1082 = vmatprep.subr.bf16.mxu0 0
          %1083 = vmatpush1.bf16.msra.mxu0 0
          %1084 = vmatprep.subr.bf16.mxu0 0
          %1085 = vmatpush1.bf16.msra.mxu0 0
          %1086 = vmatprep.subr.bf16.mxu0 0
          %1087 = vmatpush1.bf16.msra.mxu0 0
          %1088 = vmatprep.subr.bf16.mxu0 0
          %1089 = vmatpush1.bf16.msra.mxu0 0
          %1090 = vmatprep.subr.bf16.mxu0 0
          %1091 = vmatpush1.bf16.msra.mxu0 0
          %1092 = vmatprep.subr.bf16.mxu0 0
          %1093 = vmatpush1.bf16.msra.mxu0 0
          %1094 = vmatprep.subr.bf16.mxu0 0
          %1095 = vmatpush1.bf16.msra.mxu0 0
          %1096 = vmatprep.subr.bf16.mxu0 0
          %1097 = vmatpush1.bf16.msra.mxu0 0
          %1098 = vmatprep.subr.bf16.mxu0 0
          %1099 = vmatpush1.bf16.msra.mxu0 0
          %1100 = vmatprep.mubr.bf16.mxu0 0
          %1101 = vmatmul.mubr.bf16.gmra.mrb[0].mxu0 %v1066
          %v1102 = vpop.f32.mrb[0].mxu0
          %v1103 = vadd.f32 0.0, %v1102
          %v1104 = vpop.f32.mrb[0].mxu0
          %v1105 = vpop.f32.mrb[0].mxu0
          %v1106 = vadd.f32 0.0, %v1105
          %v1107 = vpop.f32.mrb[0].mxu0
          %1108 = vdwg.mxu0
          %v1109 = vadd.f32 %v1058, %v1103
          %v1110 = vadd.f32 %v1059, %v1106
          %1111 = vrot.lane.b32.xlu0 %v790, 64
          %v1112 = vpop.permute.xlu0 %1111
          %1113 = vrot.lane.b32.xlu0 %v835, 64
          %v1114 = vpop.permute.xlu0 %1113
          %v1116 = vsel %vm843, %v1112, 0
          %v1119 = vsel %vm843, %v1114, 0
          %1121 = vmatprep.subr.bf16.mxu0 0
          %1122 = vmatpush1.bf16.xpose.msra.mxu0 %v1119
          %1123 = vmatprep.subr.bf16.mxu0 0
          %1124 = vmatpush1.bf16.xpose.msra.mxu0 0
          %1125 = vmatprep.subr.bf16.mxu0 0
          %1126 = vmatpush1.bf16.xpose.msra.mxu0 0
          %1127 = vmatprep.subr.bf16.mxu0 0
          %1128 = vmatpush1.bf16.xpose.msra.mxu0 0
          %1129 = vmatprep.subr.bf16.mxu0 0
          %1130 = vmatpush1.bf16.xpose.msra.mxu0 0
          %1131 = vmatprep.subr.bf16.mxu0 0
          %1132 = vmatpush1.bf16.xpose.msra.mxu0 0
          %1133 = vmatprep.subr.bf16.mxu0 0
          %1134 = vmatpush1.bf16.xpose.msra.mxu0 0
          %1135 = vmatprep.subr.bf16.mxu0 0
          %1136 = vmatpush1.bf16.xpose.msra.mxu0 0
          %1137 = vmatprep.subr.bf16.mxu0 0
          %1138 = vmatpush1.bf16.xpose.msra.mxu0 0
          %1139 = vmatprep.subr.bf16.mxu0 0
          %1140 = vmatpush1.bf16.xpose.msra.mxu0 0
          %1141 = vmatprep.subr.bf16.mxu0 0
          %1142 = vmatpush1.bf16.xpose.msra.mxu0 0
          %1143 = vmatprep.subr.bf16.mxu0 0
          %1144 = vmatpush1.bf16.xpose.msra.mxu0 0
          %1145 = vmatprep.subr.bf16.mxu0 0
          %1146 = vmatpush1.bf16.xpose.msra.mxu0 0
          %1147 = vmatprep.subr.bf16.mxu0 0
          %1148 = vmatpush1.bf16.xpose.msra.mxu0 0
          %1149 = vmatprep.subr.bf16.mxu0 0
          %1150 = vmatpush1.bf16.xpose.msra.mxu0 0
          %1151 = vmatprep.subr.bf16.mxu0 0
          %1152 = vmatpush1.bf16.xpose.msra.mxu0 0
          %1153 = vmatprep.mubr.bf16.mxu0 0
          %1154 = vmatmul.mubr.bf16.gmra.mrb[0].mxu0 %v1116
          %v1155 = vpop.f32.mrb[0].mxu0
          %v1156 = vadd.f32 0.0, %v1155
          %v1157 = vpop.f32.mrb[0].mxu0
          %v1158 = vpop.f32.mrb[0].mxu0
          %v1159 = vadd.f32 0.0, %v1158
          %v1160 = vpop.f32.mrb[0].mxu0
          %1161 = vdwg.mxu0
          %v1162 = vsel %vm841, %v1156, -1e+30
          %v1163 = vsel %vm842, %v1159, -1e+30
          %v1164 = vsel %vm893, %v1162, -inf
          %1165 = vmax.xlane.f32.xlu0 %v1164
          %v1166 = vpop.xlane.xlu0 %1165
          %v1167 = vsel %vm893, %v1163, -inf
          %1168 = vmax.xlane.f32.xlu0 %v1167
          %v1169 = vpop.xlane.xlu0 %1168
          %v1170 = vmax.f32 %v818, %v1166
          %v1171 = vmax.f32 %v819, %v1169
          %v1172 = vsub.f32 %v818, %v1170
          %v1173 = vsub.f32 %v819, %v1171
          %v1174 = vmul.f32 %v1172, 1.442695
          %v1175 = vpow.pop %v1174
          %v1176 = vmul.f32 %v1173, 1.442695
          %v1177 = vpow.pop %v1176
          %v1178 = vsub.f32 %v1162, %v1170
          %v1179 = vsub.f32 %v1163, %v1171
          %v1180 = vmul.f32 %v1178, 1.442695
          %v1181 = vpow.pop %v1180
          %v1182 = vmul.f32 %v1179, 1.442695
          %v1183 = vpow.pop %v1182
          %v1184 = vmul.f32 %v1175, %v820
          %v1185 = vmul.f32 %v1177, %v821
          %v1186 = vsel %vm893, %v1181, 0.0
          %1187 = vadd.xlane.f32.xlu0 %v1186
          %v1188 = vpop.xlane.xlu0 %1187
          %v1189 = vsel %vm893, %v1183, 0.0
          %1190 = vadd.xlane.f32.xlu0 %v1189
          %v1191 = vpop.xlane.xlu0 %1190
          %v1192 = vadd.f32 %v1184, %v1188
          %v1193 = vadd.f32 %v1185, %v1191
          %v1194 = vmul.f32 %v1175, %v822
          %v1195 = vmul.f32 %v1177, %v823
          %v1196 = vpack.c.bf16 %v1183, %v1181
          %1197 = vrot.lane.b32.xlu0 %v838, 64
          %v1198 = vpop.permute.xlu0 %1197
          %v1201 = vsel %vm893, %v1196, 0
          %1203 = vmatprep.subr.bf16.mxu0 0
          %1204 = vmatpush1.bf16.msra.mxu0 %v1198
          %1205 = vmatprep.subr.bf16.mxu0 0
          %1206 = vmatpush1.bf16.msra.mxu0 0
          %1207 = vmatprep.subr.bf16.mxu0 0
          %1208 = vmatpush1.bf16.msra.mxu0 0
          %1209 = vmatprep.subr.bf16.mxu0 0
          %1210 = vmatpush1.bf16.msra.mxu0 0
          %1211 = vmatprep.subr.bf16.mxu0 0
          %1212 = vmatpush1.bf16.msra.mxu0 0
          %1213 = vmatprep.subr.bf16.mxu0 0
          %1214 = vmatpush1.bf16.msra.mxu0 0
          %1215 = vmatprep.subr.bf16.mxu0 0
          %1216 = vmatpush1.bf16.msra.mxu0 0
          %1217 = vmatprep.subr.bf16.mxu0 0
          %1218 = vmatpush1.bf16.msra.mxu0 0
          %1219 = vmatprep.subr.bf16.mxu0 0
          %1220 = vmatpush1.bf16.msra.mxu0 0
          %1221 = vmatprep.subr.bf16.mxu0 0
          %1222 = vmatpush1.bf16.msra.mxu0 0
          %1223 = vmatprep.subr.bf16.mxu0 0
          %1224 = vmatpush1.bf16.msra.mxu0 0
          %1225 = vmatprep.subr.bf16.mxu0 0
          %1226 = vmatpush1.bf16.msra.mxu0 0
          %1227 = vmatprep.subr.bf16.mxu0 0
          %1228 = vmatpush1.bf16.msra.mxu0 0
          %1229 = vmatprep.subr.bf16.mxu0 0
          %1230 = vmatpush1.bf16.msra.mxu0 0
          %1231 = vmatprep.subr.bf16.mxu0 0
          %1232 = vmatpush1.bf16.msra.mxu0 0
          %1233 = vmatprep.subr.bf16.mxu0 0
          %1234 = vmatpush1.bf16.msra.mxu0 0
          %1235 = vmatprep.mubr.bf16.mxu0 0
          %1236 = vmatmul.mubr.bf16.gmra.mrb[0].mxu0 %v1201
          %v1237 = vpop.f32.mrb[0].mxu0
          %v1238 = vadd.f32 0.0, %v1237
          %v1239 = vpop.f32.mrb[0].mxu0
          %v1240 = vpop.f32.mrb[0].mxu0
          %v1241 = vadd.f32 0.0, %v1240
          %v1242 = vpop.f32.mrb[0].mxu0
          %1243 = vdwg.mxu0
          %v1244 = vadd.f32 %v1194, %v1238
          %v1245 = vadd.f32 %v1195, %v1241
          %1246 = vrot.lane.b32.xlu0 %v790, 32
          %v1247 = vpop.permute.xlu0 %1246
          %1248 = vrot.lane.b32.xlu0 %v835, 32
          %v1249 = vpop.permute.xlu0 %1248
          %v1251 = vsel %vm843, %v1247, 0
          %v1254 = vsel %vm843, %v1249, 0
          %1256 = vmatprep.subr.bf16.mxu0 0
          %1257 = vmatpush1.bf16.xpose.msra.mxu0 %v1254
          %1258 = vmatprep.subr.bf16.mxu0 0
          %1259 = vmatpush1.bf16.xpose.msra.mxu0 0
          %1260 = vmatprep.subr.bf16.mxu0 0
          %1261 = vmatpush1.bf16.xpose.msra.mxu0 0
          %1262 = vmatprep.subr.bf16.mxu0 0
          %1263 = vmatpush1.bf16.xpose.msra.mxu0 0
          %1264 = vmatprep.subr.bf16.mxu0 0
          %1265 = vmatpush1.bf16.xpose.msra.mxu0 0
          %1266 = vmatprep.subr.bf16.mxu0 0
          %1267 = vmatpush1.bf16.xpose.msra.mxu0 0
          %1268 = vmatprep.subr.bf16.mxu0 0
          %1269 = vmatpush1.bf16.xpose.msra.mxu0 0
          %1270 = vmatprep.subr.bf16.mxu0 0
          %1271 = vmatpush1.bf16.xpose.msra.mxu0 0
          %1272 = vmatprep.subr.bf16.mxu0 0
          %1273 = vmatpush1.bf16.xpose.msra.mxu0 0
          %1274 = vmatprep.subr.bf16.mxu0 0
          %1275 = vmatpush1.bf16.xpose.msra.mxu0 0
          %1276 = vmatprep.subr.bf16.mxu0 0
          %1277 = vmatpush1.bf16.xpose.msra.mxu0 0
          %1278 = vmatprep.subr.bf16.mxu0 0
          %1279 = vmatpush1.bf16.xpose.msra.mxu0 0
          %1280 = vmatprep.subr.bf16.mxu0 0
          %1281 = vmatpush1.bf16.xpose.msra.mxu0 0
          %1282 = vmatprep.subr.bf16.mxu0 0
          %1283 = vmatpush1.bf16.xpose.msra.mxu0 0
          %1284 = vmatprep.subr.bf16.mxu0 0
          %1285 = vmatpush1.bf16.xpose.msra.mxu0 0
          %1286 = vmatprep.subr.bf16.mxu0 0
          %1287 = vmatpush1.bf16.xpose.msra.mxu0 0
          %1288 = vmatprep.mubr.bf16.mxu0 0
          %1289 = vmatmul.mubr.bf16.gmra.mrb[0].mxu0 %v1251
          %v1290 = vpop.f32.mrb[0].mxu0
          %v1291 = vadd.f32 0.0, %v1290
          %v1292 = vpop.f32.mrb[0].mxu0
          %v1293 = vpop.f32.mrb[0].mxu0
          %v1294 = vadd.f32 0.0, %v1293
          %v1295 = vpop.f32.mrb[0].mxu0
          %1296 = vdwg.mxu0
          %v1297 = vsel %vm841, %v1291, -1e+30
          %v1298 = vsel %vm842, %v1294, -1e+30
          %v1299 = vsel %vm893, %v1297, -inf
          %1300 = vmax.xlane.f32.xlu0 %v1299
          %v1301 = vpop.xlane.xlu0 %1300
          %v1302 = vsel %vm893, %v1298, -inf
          %1303 = vmax.xlane.f32.xlu0 %v1302
          %v1304 = vpop.xlane.xlu0 %1303
          %v1305 = vmax.f32 %v824, %v1301
          %v1306 = vmax.f32 %v825, %v1304
          %v1307 = vsub.f32 %v824, %v1305
          %v1308 = vsub.f32 %v825, %v1306
          %v1309 = vmul.f32 %v1307, 1.442695
          %v1310 = vpow.pop %v1309
          %v1311 = vmul.f32 %v1308, 1.442695
          %v1312 = vpow.pop %v1311
          %v1313 = vsub.f32 %v1297, %v1305
          %v1314 = vsub.f32 %v1298, %v1306
          %v1315 = vmul.f32 %v1313, 1.442695
          %v1316 = vpow.pop %v1315
          %v1317 = vmul.f32 %v1314, 1.442695
          %v1318 = vpow.pop %v1317
          %v1319 = vmul.f32 %v1310, %v826
          %v1320 = vmul.f32 %v1312, %v827
          %v1321 = vsel %vm893, %v1316, 0.0
          %1322 = vadd.xlane.f32.xlu0 %v1321
          %v1323 = vpop.xlane.xlu0 %1322
          %v1324 = vsel %vm893, %v1318, 0.0
          %1325 = vadd.xlane.f32.xlu0 %v1324
          %v1326 = vpop.xlane.xlu0 %1325
          %v1327 = vadd.f32 %v1319, %v1323
          %v1328 = vadd.f32 %v1320, %v1326
          %v1329 = vmul.f32 %v1310, %v828
          %v1330 = vmul.f32 %v1312, %v829
          %v1331 = vpack.c.bf16 %v1318, %v1316
          %1332 = vrot.lane.b32.xlu0 %v838, 32
          %v1333 = vpop.permute.xlu0 %1332
          %v1336 = vsel %vm893, %v1331, 0
          %1338 = vmatprep.subr.bf16.mxu0 0
          %1339 = vmatpush1.bf16.msra.mxu0 %v1333
          %1340 = vmatprep.subr.bf16.mxu0 0
          %1341 = vmatpush1.bf16.msra.mxu0 0
          %1342 = vmatprep.subr.bf16.mxu0 0
          %1343 = vmatpush1.bf16.msra.mxu0 0
          %1344 = vmatprep.subr.bf16.mxu0 0
          %1345 = vmatpush1.bf16.msra.mxu0 0
          %1346 = vmatprep.subr.bf16.mxu0 0
          %1347 = vmatpush1.bf16.msra.mxu0 0
          %1348 = vmatprep.subr.bf16.mxu0 0
          %1349 = vmatpush1.bf16.msra.mxu0 0
          %1350 = vmatprep.subr.bf16.mxu0 0
          %1351 = vmatpush1.bf16.msra.mxu0 0
          %1352 = vmatprep.subr.bf16.mxu0 0
          %1353 = vmatpush1.bf16.msra.mxu0 0
          %1354 = vmatprep.subr.bf16.mxu0 0
          %1355 = vmatpush1.bf16.msra.mxu0 0
          %1356 = vmatprep.subr.bf16.mxu0 0
          %1357 = vmatpush1.bf16.msra.mxu0 0
          %1358 = vmatprep.subr.bf16.mxu0 0
          %1359 = vmatpush1.bf16.msra.mxu0 0
          %1360 = vmatprep.subr.bf16.mxu0 0
          %1361 = vmatpush1.bf16.msra.mxu0 0
          %1362 = vmatprep.subr.bf16.mxu0 0
          %1363 = vmatpush1.bf16.msra.mxu0 0
          %1364 = vmatprep.subr.bf16.mxu0 0
          %1365 = vmatpush1.bf16.msra.mxu0 0
          %1366 = vmatprep.subr.bf16.mxu0 0
          %1367 = vmatpush1.bf16.msra.mxu0 0
          %1368 = vmatprep.subr.bf16.mxu0 0
          %1369 = vmatpush1.bf16.msra.mxu0 0
          %1370 = vmatprep.mubr.bf16.mxu0 0
          %1371 = vmatmul.mubr.bf16.gmra.mrb[0].mxu0 %v1336
          %v1372 = vpop.f32.mrb[0].mxu0
          %v1373 = vadd.f32 0.0, %v1372
          %v1374 = vpop.f32.mrb[0].mxu0
          %v1375 = vpop.f32.mrb[0].mxu0
          %v1376 = vadd.f32 0.0, %v1375
          %v1377 = vpop.f32.mrb[0].mxu0
          %1378 = vdwg.mxu0
          %v1379 = vadd.f32 %v1329, %v1373
          %v1380 = vadd.f32 %v1330, %v1376
        $region85: #{tpu_custom_call.1} parent=55 // loop_footer
          %s803 = sadd.s32 %s801, 1
        $region86: #{tpu_custom_call.1} parent=55 // loop_footer_branch
          %800 = sbr.rel target = $region82
        $region87: #{tpu_custom_call.1} parent=55 // loop_exit
          _
        %v1381 = vrcp.pop %v808
        %v1382 = vrcp.pop %v809
        %v1383 = vmul.f32 %v810, %v1381
        %v1384 = vmul.f32 %v811, %v1382
        %v1385 = vrcp.pop %v814
        %v1386 = vrcp.pop %v815
        %v1387 = vmul.f32 %v816, %v1385
        %v1388 = vmul.f32 %v817, %v1386
        %v1389 = vrcp.pop %v820
        %v1390 = vrcp.pop %v821
        %v1391 = vmul.f32 %v822, %v1389
        %v1392 = vmul.f32 %v823, %v1390
        %v1393 = vrcp.pop %v826
        %v1394 = vrcp.pop %v827
        %v1395 = vmul.f32 %v828, %v1393
        %v1396 = vmul.f32 %v829, %v1394
        %1399 = vrot.lane.b32.xlu0 %v1387, 32
        %v1400 = vpop.permute.xlu0 %1399
        %1401 = vrot.lane.b32.xlu0 %v1388, 32
        %v1402 = vpop.permute.xlu0 %1401
        %1407 = vrot.lane.b32.xlu0 %v1391, 64
        %v1408 = vpop.permute.xlu0 %1407
        %1409 = vrot.lane.b32.xlu0 %v1392, 64
        %v1410 = vpop.permute.xlu0 %1409
        %1415 = vrot.lane.b32.xlu0 %v1395, 96
        %v1416 = vpop.permute.xlu0 %1415
        %1417 = vrot.lane.b32.xlu0 %v1396, 96
        %v1418 = vpop.permute.xlu0 %1417
        %vm1421 = vcmask 261120
        %v1422 = vsel %vm1421, %v1383, %v1400
        %v1423 = vsel %vm1421, %v1384, %v1402
        %vm1424 = vcmask 523264
        %v1425 = vsel %vm1424, %v1422, %v1408
        %v1426 = vsel %vm1424, %v1423, %v1410
        %vm1427 = vcmask 785408
        %v1428 = vsel %vm1427, %v1425, %v1416
        %v1429 = vsel %vm1427, %v1426, %v1418
        %v1430 = vpack.c.bf16 %v1429, %v1428
        %1431 = vst [vmem:[#allocation4] sm:$0xff] %v1430
        %v1432 = vld [vmem:[#allocation4] sm:$0xff]
        %v1433 = vld [vmem:[#allocation13] sm:$0xf]
        %v1434 = vld [vmem:[#allocation13 + $0x4] sm:$0xf]
        %v1435 = vld [vmem:[#allocation13 + $0x8] sm:$0xf]
        %v1436 = vld [vmem:[#allocation13 + $0xc] sm:$0xf]
        %v1437 = vld [vmem:[#allocation13 + $0x10] sm:$0xf]
        %v1438 = vld [vmem:[#allocation13 + $0x14] sm:$0xf]
        %v1439 = vld [vmem:[#allocation13 + $0x18] sm:$0xf]
        %v1440 = vld [vmem:[#allocation13 + $0x1c] sm:$0xf]
        %v1441 = vld [vmem:[#allocation13 + $0x20] sm:$0xf]
        %v1442 = vld [vmem:[#allocation13 + $0x24] sm:$0xf]
        %v1443 = vld [vmem:[#allocation13 + $0x28] sm:$0xf]
        %v1444 = vld [vmem:[#allocation13 + $0x2c] sm:$0xf]
        %v1445 = vld [vmem:[#allocation13 + $0x30] sm:$0xf]
        %v1446 = vld [vmem:[#allocation13 + $0x34] sm:$0xf]
        %v1447 = vld [vmem:[#allocation13 + $0x38] sm:$0xf]
        %v1448 = vld [vmem:[#allocation13 + $0x3c] sm:$0xf]
        %v1449 = vld [vmem:[%s8] sm:$0x1]
        %v1451 = vlaneseq
        %v1452 = vshrl.u32 %v1451, 7
        %v1453 = vsub.s32 0, %v1452
        %v1454 = vrot.slane %v1449, %v1453
        %v1472 = vunpack.c.l.b16 %v1433
        %v1473 = vunpack.c.l.b16 %v1434
        %v1474 = vunpack.c.l.b16 %v1435
        %v1475 = vunpack.c.l.b16 %v1436
        %v1476 = vunpack.c.l.b16 %v1437
        %v1477 = vunpack.c.l.b16 %v1438
        %v1478 = vunpack.c.l.b16 %v1439
        %v1479 = vunpack.c.l.b16 %v1440
        %v1480 = vunpack.c.l.b16 %v1441
        %v1481 = vunpack.c.l.b16 %v1442
        %v1482 = vunpack.c.l.b16 %v1443
        %v1483 = vunpack.c.l.b16 %v1444
        %v1484 = vunpack.c.l.b16 %v1445
        %v1485 = vunpack.c.l.b16 %v1446
        %v1486 = vunpack.c.l.b16 %v1447
        %v1487 = vunpack.c.l.b16 %v1448
        %v1488 = vpack.c.b16 %v1473, %v1472
        %v1489 = vpack.c.b16 %v1475, %v1474
        %v1490 = vpack.c.b16 %v1477, %v1476
        %v1491 = vpack.c.b16 %v1479, %v1478
        %v1492 = vpack.c.b16 %v1481, %v1480
        %v1493 = vpack.c.b16 %v1483, %v1482
        %v1494 = vpack.c.b16 %v1485, %v1484
        %v1495 = vpack.c.b16 %v1487, %v1486
        %1504 = vmatprep.subr.bf16.mxu0 0
        %1505 = vmatpush1.bf16.msra.mxu0 %v1488
        %1506 = vmatprep.subr.bf16.mxu0 0
        %1507 = vmatpush1.bf16.msra.mxu0 %v1489
        %1508 = vmatprep.subr.bf16.mxu0 0
        %1509 = vmatpush1.bf16.msra.mxu0 %v1490
        %1510 = vmatprep.subr.bf16.mxu0 0
        %1511 = vmatpush1.bf16.msra.mxu0 %v1491
        %1512 = vmatprep.subr.bf16.mxu0 0
        %1513 = vmatpush1.bf16.msra.mxu0 %v1492
        %1514 = vmatprep.subr.bf16.mxu0 0
        %1515 = vmatpush1.bf16.msra.mxu0 %v1493
        %1516 = vmatprep.subr.bf16.mxu0 0
        %1517 = vmatpush1.bf16.msra.mxu0 %v1494
        %1518 = vmatprep.subr.bf16.mxu0 0
        %1519 = vmatpush1.bf16.msra.mxu0 %v1495
        %1520 = vmatprep.subr.bf16.mxu0 0
        %1521 = vmatpush1.bf16.msra.mxu0 0
        %1522 = vmatprep.subr.bf16.mxu0 0
        %1523 = vmatpush1.bf16.msra.mxu0 0
        %1524 = vmatprep.subr.bf16.mxu0 0
        %1525 = vmatpush1.bf16.msra.mxu0 0
        %1526 = vmatprep.subr.bf16.mxu0 0
        %1527 = vmatpush1.bf16.msra.mxu0 0
        %1528 = vmatprep.subr.bf16.mxu0 0
        %1529 = vmatpush1.bf16.msra.mxu0 0
        %1530 = vmatprep.subr.bf16.mxu0 0
        %1531 = vmatpush1.bf16.msra.mxu0 0
        %1532 = vmatprep.subr.bf16.mxu0 0
        %1533 = vmatpush1.bf16.msra.mxu0 0
        %1534 = vmatprep.subr.bf16.mxu0 0
        %1535 = vmatpush1.bf16.msra.mxu0 0
        %1536 = vmatprep.mubr.bf16.mxu0 0
        %1537 = vmatmul.mubr.bf16.gmra.mrb[0].mxu0 %v1432
        %v1538 = vpop.f32.mrb[0].mxu0
        %v1539 = vadd.f32 %v1454, %v1538
        %v1540 = vpop.f32.mrb[0].mxu0
        %v1541 = vpop.f32.mrb[0].mxu0
        %v1542 = vadd.f32 %v1454, %v1541
        %v1543 = vpop.f32.mrb[0].mxu0
        %1544 = vdwg.mxu0
        %1545 = vst [vmem:[%s422] sm:$0xff] %v1539
        %1546 = vst [vmem:[%s422 + $0x8] sm:$0xff] %v1542
        %s1547 = sand.u32 %s244, 1
        %s1548 = scalar_lea.sflag [#allocation7], %s1547
        %s1549 = sand.u32 %s244, 1
        %s1550 = smul.addr %s1549, 16
        %s1551 = scalar_lea.vmem [#allocation14], %s1550
        // Predicated region
        $region88: #{tpu_custom_call.1} parent=55 // pred_check
          %p1552 = pneg %p254
        $region89: #{tpu_custom_call.1} parent=55 // pred_check_branch
          %1554 = sbr.rel (%p1552) target = $region91
        $region90: #{tpu_custom_call.1} parent=55 // pred_region
          %s1555 = smul.u32 2, %s33
          %s1557 = ssub.s32 256, 256
          %1558 = vsyncadd %s1548, %s1557
          %s1559 = smul.addr %s32, 2
          %s1560 = sadd.s32 %s1555, %s1559
          %s1561 = smul.addr %s1560, 128
          %s1562 = scalar_lea.hbm %s9, %s1561
          %s1563 = sshll.u32 %s1551, 4
          %s1564 = int_to_ptr.vmem [resolvable:$true] %s1563
          %1569 = dma.vmem_to_hbm [thread:$0]  %s1564, 256, %s1562, %s1548, 128, 128, 8
        $region91: #{tpu_custom_call.1} parent=55 // pred_fallthru
          _
      $region56: #{tpu_custom_call.1} parent=5 // pred_fallthru
        _
      %p1570 = scmp.le.s32.totalorder 2, %s23
      // Predicated region
      $region92: #{tpu_custom_call.1} parent=5 // pred_check
        %p1571 = pneg %p1570
      $region93: #{tpu_custom_call.1} parent=5 // pred_check_branch
        %1573 = sbr.rel (%p1571) target = $region95
      $region94: #{tpu_custom_call.1} parent=5 // pred_region
        %s1574 = ssub.s32 %s23, 2
        // Predicated region
        $region96: #{tpu_custom_call.1} parent=94 // pred_check
          %p1575 = pneg %p260
        $region97: #{tpu_custom_call.1} parent=94 // pred_check_branch
          %1577 = sbr.rel (%p1575) target = $region99
        $region98: #{tpu_custom_call.1} parent=94 // pred_region
          %s1578 = sand.u32 %s245, 1
          %s1579 = scalar_lea.sflag [#allocation7], %s1578
          %s1580 = sand.u32 %s245, 1
          %s1581 = smul.addr %s1580, 16
          %s1582 = scalar_lea.vmem [#allocation14], %s1581
          %1583 = dma.done %s1579, 256
        $region99: #{tpu_custom_call.1} parent=94 // pred_fallthru
          _
      $region95: #{tpu_custom_call.1} parent=5 // pred_fallthru
        _
    $region6: #{tpu_custom_call.1} parent=1 // loop_footer
      %s27 = sadd.s32 1, %s23
    $region7: #{tpu_custom_call.1} parent=1 // loop_footer_branch
      %22 = sbr.rel target = $region3
    $region8: #{tpu_custom_call.1} parent=1 // loop_exit
      _
    %1584 = vsyncpa [#allocation6], 1
    %s1585 = scalar_lea.sflag [#allocation6], 1
    %1586 = vsyncpa %s1585, 1
    %1587 = vsyncpa [#allocation9], 1
    %1588 = vsyncpa [#allocation12], 1
    %1589 = vsyncpa [#allocation7], 1
    %s1590 = scalar_lea.sflag [#allocation7], 1
    %1591 = vsyncpa %s1590, 1

</llo_original>
